<compile_context>
chip_gen: v5e
topology: v5e:2x2
jax: 0.10.0
libtpu: 0.0.40
codegen_flags: <defaults>
</compile_context>

<pallas_src>
import math
import jax
import jax.numpy as jnp
from jax.experimental import pallas as pl
from jax.experimental.pallas import tpu as pltpu

LANE = 128          # lane width of every slab / activation
_D2 = 64            # output width of FFNN layer 2 (Linear(F, 64))
_D3 = 8             # output width of FFNN layer 3 (Linear(64, 8))


def _ceil_to(x, m):
    return ((x + m - 1) // m) * m


def _make_kernel(T, BB, Dw, H, offs):
    """Build the fused LSTM+FFNN kernel for static (T, BB, Dw, H)."""
    o_wih1, o_whh1, o_wih2, o_whh2, o_w1a, o_w2f, o_w3f = offs
    bf16 = jnp.bfloat16

    def kernel(weather_ref, bbias_ref, w_ref, f_ref, out_ref):
        # f32 bias / small-weight slab: one 128-lane row per operand.
        fs = f_ref[...]                      # (8, LANE) f32
        b1 = fs[0:1, :]                      # LSTM L0 bias (bih+bhh), 4H lanes
        b2 = fs[1:2, :]                      # LSTM L1 bias
        bf2 = fs[2:3, :]                     # FFNN layer-2 bias (64 lanes)
        bf3 = fs[3:4, :]                     # FFNN layer-3 bias (+ unit lane)
        w4row = fs[4:5, :]                   # final 8->1 row (+ b4 at lane 8)

        # bf16 LSTM weights, row-sliced from the packed slab (one-time loads,
        # every segment offset is 16-row aligned for the bf16 tile).
        wih1 = w_ref[o_wih1:o_wih1 + Dw, :]  # (Dw, 4H)
        whh1 = w_ref[o_whh1:o_whh1 + H, :]   # (H, 4H)
        wih2 = w_ref[o_wih2:o_wih2 + H, :]
        whh2 = w_ref[o_whh2:o_whh2 + H, :]

        # Hoisted layer-1 input projection: one matmul covers all T steps of
        # this batch block, removing T dependent MXU pushes from the serial
        # chain.  Rows are time-major, so per-step slices below start on
        # 8-sublane boundaries (BB is a multiple of 8).
        x1_all = jnp.dot(weather_ref[...], wih1,
                         preferred_element_type=jnp.float32) + b1   # (T*BB, 4H)

        def gates_to_state(g, c):
            # 2 EUP pushes on the whole (BB, 4H) gate slab instead of 4 sliced
            # nonlinearities; gate order i, f, g, o (PyTorch).
            sig = jax.nn.sigmoid(g)
            th = jnp.tanh(g)
            i = sig[:, 0 * H:1 * H]
            f = sig[:, 1 * H:2 * H]
            o = sig[:, 3 * H:4 * H]
            gg = th[:, 2 * H:3 * H]
            c_new = f * c + i * gg
            h_new = o * jnp.tanh(c_new)
            return h_new, c_new

        zf = jnp.zeros((BB, H), jnp.float32)
        h1, c1, h2, c2, acc = zf, zf, zf, zf, zf
        h1b = zf.astype(bf16)                # bf16 carries: cast once per step
        h2b = zf.astype(bf16)

        # Fully unrolled recurrence (T is a static Python int): the scheduler
        # sees all T steps at once and interleaves MXU/EUP/VPU work.
        # TODO(synk): for long sequences (T >> 32) switch to
        # lax.fori_loop(..., unroll=4..8) with aligned pl.ds slices.
        for t in range(T):
            g1 = x1_all[t * BB:(t + 1) * BB, :] + jnp.dot(
                h1b, whh1, preferred_element_type=jnp.float32)
            h1, c1 = gates_to_state(g1, c1)
            h1b = h1.astype(bf16)
            # Layer-2 x/h matmuls kept split: the h2-side dot is off the h1
            # critical path; a [h1|h2] concat would add a relayout into the
            # serial chain.
            g2 = (jnp.dot(h1b, wih2, preferred_element_type=jnp.float32)
                  + jnp.dot(h2b, whh2, preferred_element_type=jnp.float32)
                  + b2)
            h2, c2 = gates_to_state(g2, c2)
            h2b = h2.astype(bf16)
            acc = acc + h2

        # FFNN head -- everything stays 128 lanes wide (zero padded), so all
        # dots / relus are lane-dense.  1/T (temporal mean) is pre-folded into
        # w1a; the building-feature contribution + layer-1 bias arrive as the
        # per-sample bbias slab (precomputed in XLA, off the critical path).
        w1a = w_ref[o_w1a:o_w1a + H, :]          # (H, LANE)
        w2f = w_ref[o_w2f:o_w2f + LANE, :]       # (LANE, LANE)
        w3f = w_ref[o_w3f:o_w3f + LANE, :]       # (LANE, LANE)

        z = jnp.maximum(jnp.dot(acc.astype(bf16), w1a,
                                preferred_element_type=jnp.float32)
                        + bbias_ref[...], 0.0)
        z = jnp.maximum(jnp.dot(z.astype(bf16), w2f,
                                preferred_element_type=jnp.float32) + bf2, 0.0)
        z = jnp.maximum(jnp.dot(z.astype(bf16), w3f,
                                preferred_element_type=jnp.float32) + bf3, 0.0)
        # Final 8 -> 1 projection on the VPU (multiply + lane reduce).  The
        # output bias b4 is folded in through an always-on unit feature that
        # bf3 / w4row carry at lane _D3 (z[:, _D3] == 1 after the relu).
        out_ref[...] = jnp.sum(z * w4row, axis=-1, keepdims=True)
        # TODO(synk): for very large batch blocks, emit a (1, BB) lane-dense
        # output block instead of (BB, 1) to avoid masked vst stores.

    return kernel


def lstm_ffnn_forward(weather, building, p):
    """weather: (B, T, Dw) batch_first like PyTorch; building: (B, Db)."""
    B, T, Dw = weather.shape
    Db = building.shape[1]
    H = p["whh_l0"].shape[1]
    F = p["w1"].shape[0]
    f32, bf16 = jnp.float32, jnp.bfloat16

    assert 4 * H <= LANE and F <= LANE and Dw <= LANE and _D2 <= LANE

    # --- batch padding / blocking -------------------------------------------
    # Pad the batch to a multiple of 8 sublanes so per-step slices are
    # tile-aligned, and block it over a parallel grid axis.
    if B <= LANE:
        Bp = _ceil_to(B, 8)
        BB = Bp
    else:
        Bp = _ceil_to(B, LANE)
        BB = LANE
    G = Bp // BB

    # --- operand packing: bf16 weight slab -----------------------------------
    o_wih1 = 0
    o_whh1 = o_wih1 + _ceil_to(Dw, 16)
    o_wih2 = o_whh1 + _ceil_to(H, 16)
    o_whh2 = o_wih2 + _ceil_to(H, 16)
    o_w1a = o_whh2 + _ceil_to(H, 16)
    o_w2f = o_w1a + _ceil_to(H, 16)
    o_w3f = o_w2f + LANE
    w_rows = o_w3f + LANE
    offs = (o_wih1, o_whh1, o_wih2, o_whh2, o_w1a, o_w2f, o_w3f)

    wslab = jnp.zeros((w_rows, LANE), f32)
    wslab = wslab.at[o_wih1:o_wih1 + Dw, :4 * H].set(p["wih_l0"].T)
    wslab = wslab.at[o_whh1:o_whh1 + H, :4 * H].set(p["whh_l0"].T)
    wslab = wslab.at[o_wih2:o_wih2 + H, :4 * H].set(p["wih_l1"].T)
    wslab = wslab.at[o_whh2:o_whh2 + H, :4 * H].set(p["whh_l1"].T)
    wslab = wslab.at[o_w1a:o_w1a + H, :F].set(p["w1"][:, :H].T / T)  # mean folded
    wslab = wslab.at[o_w2f:o_w2f + F, :_D2].set(p["w2"].T)
    wslab = wslab.at[o_w3f:o_w3f + _D2, :_D3].set(p["w3"].T)
    wslab = wslab.astype(bf16)

    # --- operand packing: f32 bias / small-weight slab ------------------------
    fslab = jnp.zeros((8, LANE), f32)
    fslab = fslab.at[0, :4 * H].set(p["bih_l0"] + p["bhh_l0"])
    fslab = fslab.at[1, :4 * H].set(p["bih_l1"] + p["bhh_l1"])
    fslab = fslab.at[2, :_D2].set(p["b2"])
    fslab = fslab.at[3, :_D3].set(p["b3"])
    fslab = fslab.at[3, _D3].set(1.0)           # always-on unit feature ...
    fslab = fslab.at[4, :_D3].set(p["w4"][0])
    fslab = fslab.at[4, _D3].set(p["b4"][0])    # ... carries the final bias b4

    # building features are independent of the recurrence: fold their FFNN
    # layer-1 contribution (+ the layer-1 bias) into a per-sample bias slab
    # outside the kernel (XLA), padded to 128 lanes.
    building_p = jnp.zeros((Bp, Db), f32).at[:B].set(building.astype(f32))
    bbias = jnp.zeros((Bp, LANE), f32).at[:, :F].set(
        building_p @ p["w1"][:, H:].T.astype(f32) + p["b1"].astype(f32))

    # weather: pad batch, order rows batch-block major (time-major inside a
    # block) so each grid step reads one contiguous (T*BB, Dw) slab and the
    # per-step slices inside the kernel are 8-sublane aligned.
    weather_p = jnp.zeros((Bp, T, Dw), f32).at[:B].set(weather.astype(f32))
    weather_tm = (weather_p.reshape(G, BB, T, Dw)
                  .transpose(0, 2, 1, 3)
                  .reshape(G * T * BB, Dw)
                  .astype(bf16))

    kernel = _make_kernel(T, BB, Dw, H, offs)
    vmem = pltpu.MemorySpace.VMEM

    out = pl.pallas_call(
        kernel,
        out_shape=jax.ShapeDtypeStruct((Bp, 1), jnp.float32),
        grid=(G,),
        in_specs=[
            pl.BlockSpec((T * BB, Dw), lambda b: (b, 0), memory_space=vmem),
            pl.BlockSpec((BB, LANE), lambda b: (b, 0), memory_space=vmem),
            pl.BlockSpec((w_rows, LANE), lambda b: (0, 0), memory_space=vmem),
            pl.BlockSpec((8, LANE), lambda b: (0, 0), memory_space=vmem),
        ],
        out_specs=pl.BlockSpec((BB, 1), lambda b: (b, 0), memory_space=vmem),
        compiler_params=pltpu.CompilerParams(
            dimension_semantics=("parallel",)),
    )(weather_tm, bbias, wslab, fslab)
    return out[:B]


def init_params(key, weather_dim, building_dim, H, F):
    """Deterministic PyTorch-style uniform init for all parameters."""
    ks = list(jax.random.split(key, 32))
    p = {}

    def u(k, shape, bound):
        return jax.random.uniform(k, shape, jnp.float32, -bound, bound)

    kb = 1.0 / math.sqrt(H)
    # LSTM layer 0 (input_size = weather_dim)
    p["wih_l0"] = u(ks[0], (4 * H, weather_dim), kb)
    p["whh_l0"] = u(ks[1], (4 * H, H), kb)
    p["bih_l0"] = u(ks[2], (4 * H,), kb)
    p["bhh_l0"] = u(ks[3], (4 * H,), kb)
    # LSTM layer 1 (input_size = H)
    p["wih_l1"] = u(ks[4], (4 * H, H), kb)
    p["whh_l1"] = u(ks[5], (4 * H, H), kb)
    p["bih_l1"] = u(ks[6], (4 * H,), kb)
    p["bhh_l1"] = u(ks[7], (4 * H,), kb)

    # FFNN linears (torch.nn.Linear default init)
    def lin(ki, kj, out_f, in_f):
        b = 1.0 / math.sqrt(in_f)
        return u(ki, (out_f, in_f), b), u(kj, (out_f,), b)

    p["w1"], p["b1"] = lin(ks[8], ks[9], F, H + building_dim)
    p["w2"], p["b2"] = lin(ks[10], ks[11], 64, F)
    p["w3"], p["b3"] = lin(ks[12], ks[13], 8, 64)
    p["w4"], p["b4"] = lin(ks[14], ks[15], 1, 8)
    return p


def reference_forward(weather, building, p):
    """Pure-JAX f32 reference mirroring the PyTorch forward (eval mode)."""
    B, T, Dw = weather.shape
    H = p["whh_l0"].shape[1]

    def cell(x, h, c, wih, whh, bih, bhh):
        g = x @ wih.T + bih + h @ whh.T + bhh
        i = jax.nn.sigmoid(g[:, :H]); f = jax.nn.sigmoid(g[:, H:2 * H])
        gg = jnp.tanh(g[:, 2 * H:3 * H]); o = jax.nn.sigmoid(g[:, 3 * H:])
        c = f * c + i * gg
        return o * jnp.tanh(c), c

    h1 = c1 = h2 = c2 = jnp.zeros((B, H), jnp.float32)
    outs = []
    for t in range(T):
        h1, c1 = cell(weather[:, t, :], h1, c1, p["wih_l0"], p["whh_l0"], p["bih_l0"], p["bhh_l0"])
        h2, c2 = cell(h1, h2, c2, p["wih_l1"], p["whh_l1"], p["bih_l1"], p["bhh_l1"])
        outs.append(h2)
    emb = jnp.stack(outs, axis=1).mean(axis=1)
    z = jnp.concatenate([emb, building], axis=1)
    z = jnp.maximum(z @ p["w1"].T + p["b1"], 0.0)
    z = jnp.maximum(z @ p["w2"].T + p["b2"], 0.0)
    z = jnp.maximum(z @ p["w3"].T + p["b3"], 0.0)
    return z @ p["w4"].T + p["b4"]


if __name__ == "__main__":
    B, T = 2, 8
    weather_dim, building_dim = 8, 4
    lstm_hidden_dim, ffnn_hidden_dim = 32, 32

    key = jax.random.PRNGKey(0)
    k_w, k_b, k_p = jax.random.split(key, 3)
    weather = jax.random.normal(k_w, (B, T, weather_dim), jnp.float32)
    building = jax.random.normal(k_b, (B, building_dim), jnp.float32)
    params = init_params(k_p, weather_dim, building_dim, lstm_hidden_dim, ffnn_hidden_dim)

    out = lstm_ffnn_forward(weather, building, params)
    out = jax.block_until_ready(out)

    ref = reference_forward(weather, building, params)
    assert out.shape == (B, 1)
    # bf16 MXU inputs compound rounding over the T-step recurrence -> loosened
    # tolerance vs. the pure-f32 reference.
    assert jnp.allclose(out, ref, rtol=3e-2, atol=3e-2), (out, ref)
    print("KERNEL_OK")
</pallas_src>

<mosaic_0001>
module attributes {stable_mosaic.version = 11 : i64} {
  func.func @kernel(%arg0: i32, %arg1: memref<64x8xbf16, #tpu.memory_space<vmem>>, %arg2: memref<8x128xf32, #tpu.memory_space<vmem>>, %arg3: memref<400x128xbf16, #tpu.memory_space<vmem>>, %arg4: memref<8x128xf32, #tpu.memory_space<vmem>>, %arg5: memref<8x1xf32, #tpu.memory_space<vmem>>) attributes {dimension_semantics = [#tpu.dimension_semantics<parallel>], iteration_bounds = array<i64: 1>, scalar_prefetch = 0 : i64, scratch_operands = 0 : i64, tpu.core_type = #tpu.core_type<tc>, window_params = [{transform_indices = @transform_0, window_bounds = array<i64: 64, 8>}, {transform_indices = @transform_1, window_bounds = array<i64: 8, 128>}, {pipeline_mode = #tpu.pipeline_mode<synchronous>, transform_indices = @transform_2, window_bounds = array<i64: 400, 128>}, {pipeline_mode = #tpu.pipeline_mode<synchronous>, transform_indices = @transform_3, window_bounds = array<i64: 8, 128>}, {transform_indices = @transform_4, window_bounds = array<i64: 8, 1>}]} {
    %c0 = arith.constant 0 : index
    %c0_0 = arith.constant 0 : index
    %0 = vector.load %arg4[%c0, %c0_0] : memref<8x128xf32, #tpu.memory_space<vmem>>, vector<8x128xf32>
    %1 = vector.extract_strided_slice %0 {offsets = [0, 0], sizes = [1, 128], strides = [1, 1]} : vector<8x128xf32> to vector<1x128xf32>
    %2 = vector.extract_strided_slice %0 {offsets = [1, 0], sizes = [1, 128], strides = [1, 1]} : vector<8x128xf32> to vector<1x128xf32>
    %3 = vector.extract_strided_slice %0 {offsets = [2, 0], sizes = [1, 128], strides = [1, 1]} : vector<8x128xf32> to vector<1x128xf32>
    %4 = vector.extract_strided_slice %0 {offsets = [3, 0], sizes = [1, 128], strides = [1, 1]} : vector<8x128xf32> to vector<1x128xf32>
    %5 = vector.extract_strided_slice %0 {offsets = [4, 0], sizes = [1, 128], strides = [1, 1]} : vector<8x128xf32> to vector<1x128xf32>
    %c0_1 = arith.constant 0 : index
    %c0_2 = arith.constant 0 : index
    %6 = vector.load %arg3[%c0_1, %c0_2] : memref<400x128xbf16, #tpu.memory_space<vmem>>, vector<8x128xbf16>
    %c16 = arith.constant 16 : index
    %c0_3 = arith.constant 0 : index
    %7 = vector.load %arg3[%c16, %c0_3] : memref<400x128xbf16, #tpu.memory_space<vmem>>, vector<32x128xbf16>
    %c48 = arith.constant 48 : index
    %c0_4 = arith.constant 0 : index
    %8 = vector.load %arg3[%c48, %c0_4] : memref<400x128xbf16, #tpu.memory_space<vmem>>, vector<32x128xbf16>
    %c80 = arith.constant 80 : index
    %c0_5 = arith.constant 0 : index
    %9 = vector.load %arg3[%c80, %c0_5] : memref<400x128xbf16, #tpu.memory_space<vmem>>, vector<32x128xbf16>
    %c0_6 = arith.constant 0 : index
    %c0_7 = arith.constant 0 : index
    %10 = vector.load %arg1[%c0_6, %c0_7] : memref<64x8xbf16, #tpu.memory_space<vmem>>, vector<64x8xbf16>
    %cst = arith.constant dense<0.000000e+00> : vector<64x128xf32>
    %11 = tpu.matmul %10, %6, %cst {dimension_numbers = #tpu.dot_dimension_numbers<[1], [0], [0], [1], [0, 0, 1, 1], [], []>} : vector<64x8xbf16>, vector<8x128xbf16>, vector<64x128xf32> -> vector<64x128xf32>
    %12 = vector.broadcast %1 : vector<1x128xf32> to vector<64x128xf32>
    %13 = arith.addf %11, %12 : vector<64x128xf32>
    %cst_8 = arith.constant 0.000000e+00 : f32
    %14 = vector.broadcast %cst_8 : f32 to vector<8x32xf32>
    %15 = arith.truncf %14 : vector<8x32xf32> to vector<8x32xbf16>
    %16 = arith.truncf %14 : vector<8x32xf32> to vector<8x32xbf16>
    %17 = vector.extract_strided_slice %13 {offsets = [0, 0], sizes = [8, 128], strides = [1, 1]} : vector<64x128xf32> to vector<8x128xf32>
    %cst_9 = arith.constant dense<0.000000e+00> : vector<8x128xf32>
    %18 = tpu.matmul %15, %7, %cst_9 {dimension_numbers = #tpu.dot_dimension_numbers<[1], [0], [0], [1], [0, 0, 1, 1], [], []>} : vector<8x32xbf16>, vector<32x128xbf16>, vector<8x128xf32> -> vector<8x128xf32>
    %19 = arith.addf %17, %18 : vector<8x128xf32>
    %20 = arith.negf %19 : vector<8x128xf32>
    %21 = math.exp %20 : vector<8x128xf32>
    %cst_10 = arith.constant 1.000000e+00 : f32
    %22 = vector.broadcast %cst_10 : f32 to vector<8x128xf32>
    %23 = arith.addf %22, %21 : vector<8x128xf32>
    %24 = arith.divf %22, %23 : vector<8x128xf32>
    %25 = math.tanh %19 : vector<8x128xf32>
    %26 = vector.extract_strided_slice %24 {offsets = [0, 0], sizes = [8, 32], strides = [1, 1]} : vector<8x128xf32> to vector<8x32xf32>
    %27 = vector.extract_strided_slice %24 {offsets = [0, 32], sizes = [8, 32], strides = [1, 1]} : vector<8x128xf32> to vector<8x32xf32>
    %28 = vector.extract_strided_slice %24 {offsets = [0, 96], sizes = [8, 32], strides = [1, 1]} : vector<8x128xf32> to vector<8x32xf32>
    %29 = vector.extract_strided_slice %25 {offsets = [0, 64], sizes = [8, 32], strides = [1, 1]} : vector<8x128xf32> to vector<8x32xf32>
    %30 = arith.mulf %27, %14 : vector<8x32xf32>
    %31 = arith.mulf %26, %29 : vector<8x32xf32>
    %32 = arith.addf %30, %31 : vector<8x32xf32>
    %33 = math.tanh %32 : vector<8x32xf32>
    %34 = arith.mulf %28, %33 : vector<8x32xf32>
    %35 = arith.truncf %34 : vector<8x32xf32> to vector<8x32xbf16>
    %cst_11 = arith.constant dense<0.000000e+00> : vector<8x128xf32>
    %36 = tpu.matmul %35, %8, %cst_11 {dimension_numbers = #tpu.dot_dimension_numbers<[1], [0], [0], [1], [0, 0, 1, 1], [], []>} : vector<8x32xbf16>, vector<32x128xbf16>, vector<8x128xf32> -> vector<8x128xf32>
    %cst_12 = arith.constant dense<0.000000e+00> : vector<8x128xf32>
    %37 = tpu.matmul %16, %9, %cst_12 {dimension_numbers = #tpu.dot_dimension_numbers<[1], [0], [0], [1], [0, 0, 1, 1], [], []>} : vector<8x32xbf16>, vector<32x128xbf16>, vector<8x128xf32> -> vector<8x128xf32>
    %38 = arith.addf %36, %37 : vector<8x128xf32>
    %39 = vector.broadcast %2 : vector<1x128xf32> to vector<8x128xf32>
    %40 = arith.addf %38, %39 : vector<8x128xf32>
    %41 = arith.negf %40 : vector<8x128xf32>
    %42 = math.exp %41 : vector<8x128xf32>
    %cst_13 = arith.constant 1.000000e+00 : f32
    %43 = vector.broadcast %cst_13 : f32 to vector<8x128xf32>
    %44 = arith.addf %43, %42 : vector<8x128xf32>
    %45 = arith.divf %43, %44 : vector<8x128xf32>
    %46 = math.tanh %40 : vector<8x128xf32>
    %47 = vector.extract_strided_slice %45 {offsets = [0, 0], sizes = [8, 32], strides = [1, 1]} : vector<8x128xf32> to vector<8x32xf32>
    %48 = vector.extract_strided_slice %45 {offsets = [0, 32], sizes = [8, 32], strides = [1, 1]} : vector<8x128xf32> to vector<8x32xf32>
    %49 = vector.extract_strided_slice %45 {offsets = [0, 96], sizes = [8, 32], strides = [1, 1]} : vector<8x128xf32> to vector<8x32xf32>
    %50 = vector.extract_strided_slice %46 {offsets = [0, 64], sizes = [8, 32], strides = [1, 1]} : vector<8x128xf32> to vector<8x32xf32>
    %51 = arith.mulf %48, %14 : vector<8x32xf32>
    %52 = arith.mulf %47, %50 : vector<8x32xf32>
    %53 = arith.addf %51, %52 : vector<8x32xf32>
    %54 = math.tanh %53 : vector<8x32xf32>
    %55 = arith.mulf %49, %54 : vector<8x32xf32>
    %56 = arith.truncf %55 : vector<8x32xf32> to vector<8x32xbf16>
    %57 = arith.addf %14, %55 : vector<8x32xf32>
    %58 = vector.extract_strided_slice %13 {offsets = [8, 0], sizes = [8, 128], strides = [1, 1]} : vector<64x128xf32> to vector<8x128xf32>
    %cst_14 = arith.constant dense<0.000000e+00> : vector<8x128xf32>
    %59 = tpu.matmul %35, %7, %cst_14 {dimension_numbers = #tpu.dot_dimension_numbers<[1], [0], [0], [1], [0, 0, 1, 1], [], []>} : vector<8x32xbf16>, vector<32x128xbf16>, vector<8x128xf32> -> vector<8x128xf32>
    %60 = arith.addf %58, %59 : vector<8x128xf32>
    %61 = arith.negf %60 : vector<8x128xf32>
    %62 = math.exp %61 : vector<8x128xf32>
    %cst_15 = arith.constant 1.000000e+00 : f32
    %63 = vector.broadcast %cst_15 : f32 to vector<8x128xf32>
    %64 = arith.addf %63, %62 : vector<8x128xf32>
    %65 = arith.divf %63, %64 : vector<8x128xf32>
    %66 = math.tanh %60 : vector<8x128xf32>
    %67 = vector.extract_strided_slice %65 {offsets = [0, 0], sizes = [8, 32], strides = [1, 1]} : vector<8x128xf32> to vector<8x32xf32>
    %68 = vector.extract_strided_slice %65 {offsets = [0, 32], sizes = [8, 32], strides = [1, 1]} : vector<8x128xf32> to vector<8x32xf32>
    %69 = vector.extract_strided_slice %65 {offsets = [0, 96], sizes = [8, 32], strides = [1, 1]} : vector<8x128xf32> to vector<8x32xf32>
    %70 = vector.extract_strided_slice %66 {offsets = [0, 64], sizes = [8, 32], strides = [1, 1]} : vector<8x128xf32> to vector<8x32xf32>
    %71 = arith.mulf %68, %32 : vector<8x32xf32>
    %72 = arith.mulf %67, %70 : vector<8x32xf32>
    %73 = arith.addf %71, %72 : vector<8x32xf32>
    %74 = math.tanh %73 : vector<8x32xf32>
    %75 = arith.mulf %69, %74 : vector<8x32xf32>
    %76 = arith.truncf %75 : vector<8x32xf32> to vector<8x32xbf16>
    %cst_16 = arith.constant dense<0.000000e+00> : vector<8x128xf32>
    %77 = tpu.matmul %76, %8, %cst_16 {dimension_numbers = #tpu.dot_dimension_numbers<[1], [0], [0], [1], [0, 0, 1, 1], [], []>} : vector<8x32xbf16>, vector<32x128xbf16>, vector<8x128xf32> -> vector<8x128xf32>
    %cst_17 = arith.constant dense<0.000000e+00> : vector<8x128xf32>
    %78 = tpu.matmul %56, %9, %cst_17 {dimension_numbers = #tpu.dot_dimension_numbers<[1], [0], [0], [1], [0, 0, 1, 1], [], []>} : vector<8x32xbf16>, vector<32x128xbf16>, vector<8x128xf32> -> vector<8x128xf32>
    %79 = arith.addf %77, %78 : vector<8x128xf32>
    %80 = vector.broadcast %2 : vector<1x128xf32> to vector<8x128xf32>
    %81 = arith.addf %79, %80 : vector<8x128xf32>
    %82 = arith.negf %81 : vector<8x128xf32>
    %83 = math.exp %82 : vector<8x128xf32>
    %cst_18 = arith.constant 1.000000e+00 : f32
    %84 = vector.broadcast %cst_18 : f32 to vector<8x128xf32>
    %85 = arith.addf %84, %83 : vector<8x128xf32>
    %86 = arith.divf %84, %85 : vector<8x128xf32>
    %87 = math.tanh %81 : vector<8x128xf32>
    %88 = vector.extract_strided_slice %86 {offsets = [0, 0], sizes = [8, 32], strides = [1, 1]} : vector<8x128xf32> to vector<8x32xf32>
    %89 = vector.extract_strided_slice %86 {offsets = [0, 32], sizes = [8, 32], strides = [1, 1]} : vector<8x128xf32> to vector<8x32xf32>
    %90 = vector.extract_strided_slice %86 {offsets = [0, 96], sizes = [8, 32], strides = [1, 1]} : vector<8x128xf32> to vector<8x32xf32>
    %91 = vector.extract_strided_slice %87 {offsets = [0, 64], sizes = [8, 32], strides = [1, 1]} : vector<8x128xf32> to vector<8x32xf32>
    %92 = arith.mulf %89, %53 : vector<8x32xf32>
    %93 = arith.mulf %88, %91 : vector<8x32xf32>
    %94 = arith.addf %92, %93 : vector<8x32xf32>
    %95 = math.tanh %94 : vector<8x32xf32>
    %96 = arith.mulf %90, %95 : vector<8x32xf32>
    %97 = arith.truncf %96 : vector<8x32xf32> to vector<8x32xbf16>
    %98 = arith.addf %57, %96 : vector<8x32xf32>
    %99 = vector.extract_strided_slice %13 {offsets = [16, 0], sizes = [8, 128], strides = [1, 1]} : vector<64x128xf32> to vector<8x128xf32>
    %cst_19 = arith.constant dense<0.000000e+00> : vector<8x128xf32>
    %100 = tpu.matmul %76, %7, %cst_19 {dimension_numbers = #tpu.dot_dimension_numbers<[1], [0], [0], [1], [0, 0, 1, 1], [], []>} : vector<8x32xbf16>, vector<32x128xbf16>, vector<8x128xf32> -> vector<8x128xf32>
    %101 = arith.addf %99, %100 : vector<8x128xf32>
    %102 = arith.negf %101 : vector<8x128xf32>
    %103 = math.exp %102 : vector<8x128xf32>
    %cst_20 = arith.constant 1.000000e+00 : f32
    %104 = vector.broadcast %cst_20 : f32 to vector<8x128xf32>
    %105 = arith.addf %104, %103 : vector<8x128xf32>
    %106 = arith.divf %104, %105 : vector<8x128xf32>
    %107 = math.tanh %101 : vector<8x128xf32>
    %108 = vector.extract_strided_slice %106 {offsets = [0, 0], sizes = [8, 32], strides = [1, 1]} : vector<8x128xf32> to vector<8x32xf32>
    %109 = vector.extract_strided_slice %106 {offsets = [0, 32], sizes = [8, 32], strides = [1, 1]} : vector<8x128xf32> to vector<8x32xf32>
    %110 = vector.extract_strided_slice %106 {offsets = [0, 96], sizes = [8, 32], strides = [1, 1]} : vector<8x128xf32> to vector<8x32xf32>
    %111 = vector.extract_strided_slice %107 {offsets = [0, 64], sizes = [8, 32], strides = [1, 1]} : vector<8x128xf32> to vector<8x32xf32>
    %112 = arith.mulf %109, %73 : vector<8x32xf32>
    %113 = arith.mulf %108, %111 : vector<8x32xf32>
    %114 = arith.addf %112, %113 : vector<8x32xf32>
    %115 = math.tanh %114 : vector<8x32xf32>
    %116 = arith.mulf %110, %115 : vector<8x32xf32>
    %117 = arith.truncf %116 : vector<8x32xf32> to vector<8x32xbf16>
    %cst_21 = arith.constant dense<0.000000e+00> : vector<8x128xf32>
    %118 = tpu.matmul %117, %8, %cst_21 {dimension_numbers = #tpu.dot_dimension_numbers<[1], [0], [0], [1], [0, 0, 1, 1], [], []>} : vector<8x32xbf16>, vector<32x128xbf16>, vector<8x128xf32> -> vector<8x128xf32>
    %cst_22 = arith.constant dense<0.000000e+00> : vector<8x128xf32>
    %119 = tpu.matmul %97, %9, %cst_22 {dimension_numbers = #tpu.dot_dimension_numbers<[1], [0], [0], [1], [0, 0, 1, 1], [], []>} : vector<8x32xbf16>, vector<32x128xbf16>, vector<8x128xf32> -> vector<8x128xf32>
    %120 = arith.addf %118, %119 : vector<8x128xf32>
    %121 = vector.broadcast %2 : vector<1x128xf32> to vector<8x128xf32>
    %122 = arith.addf %120, %121 : vector<8x128xf32>
    %123 = arith.negf %122 : vector<8x128xf32>
    %124 = math.exp %123 : vector<8x128xf32>
    %cst_23 = arith.constant 1.000000e+00 : f32
    %125 = vector.broadcast %cst_23 : f32 to vector<8x128xf32>
    %126 = arith.addf %125, %124 : vector<8x128xf32>
    %127 = arith.divf %125, %126 : vector<8x128xf32>
    %128 = math.tanh %122 : vector<8x128xf32>
    %129 = vector.extract_strided_slice %127 {offsets = [0, 0], sizes = [8, 32], strides = [1, 1]} : vector<8x128xf32> to vector<8x32xf32>
    %130 = vector.extract_strided_slice %127 {offsets = [0, 32], sizes = [8, 32], strides = [1, 1]} : vector<8x128xf32> to vector<8x32xf32>
    %131 = vector.extract_strided_slice %127 {offsets = [0, 96], sizes = [8, 32], strides = [1, 1]} : vector<8x128xf32> to vector<8x32xf32>
    %132 = vector.extract_strided_slice %128 {offsets = [0, 64], sizes = [8, 32], strides = [1, 1]} : vector<8x128xf32> to vector<8x32xf32>
    %133 = arith.mulf %130, %94 : vector<8x32xf32>
    %134 = arith.mulf %129, %132 : vector<8x32xf32>
    %135 = arith.addf %133, %134 : vector<8x32xf32>
    %136 = math.tanh %135 : vector<8x32xf32>
    %137 = arith.mulf %131, %136 : vector<8x32xf32>
    %138 = arith.truncf %137 : vector<8x32xf32> to vector<8x32xbf16>
    %139 = arith.addf %98, %137 : vector<8x32xf32>
    %140 = vector.extract_strided_slice %13 {offsets = [24, 0], sizes = [8, 128], strides = [1, 1]} : vector<64x128xf32> to vector<8x128xf32>
    %cst_24 = arith.constant dense<0.000000e+00> : vector<8x128xf32>
    %141 = tpu.matmul %117, %7, %cst_24 {dimension_numbers = #tpu.dot_dimension_numbers<[1], [0], [0], [1], [0, 0, 1, 1], [], []>} : vector<8x32xbf16>, vector<32x128xbf16>, vector<8x128xf32> -> vector<8x128xf32>
    %142 = arith.addf %140, %141 : vector<8x128xf32>
    %143 = arith.negf %142 : vector<8x128xf32>
    %144 = math.exp %143 : vector<8x128xf32>
    %cst_25 = arith.constant 1.000000e+00 : f32
    %145 = vector.broadcast %cst_25 : f32 to vector<8x128xf32>
    %146 = arith.addf %145, %144 : vector<8x128xf32>
    %147 = arith.divf %145, %146 : vector<8x128xf32>
    %148 = math.tanh %142 : vector<8x128xf32>
    %149 = vector.extract_strided_slice %147 {offsets = [0, 0], sizes = [8, 32], strides = [1, 1]} : vector<8x128xf32> to vector<8x32xf32>
    %150 = vector.extract_strided_slice %147 {offsets = [0, 32], sizes = [8, 32], strides = [1, 1]} : vector<8x128xf32> to vector<8x32xf32>
    %151 = vector.extract_strided_slice %147 {offsets = [0, 96], sizes = [8, 32], strides = [1, 1]} : vector<8x128xf32> to vector<8x32xf32>
    %152 = vector.extract_strided_slice %148 {offsets = [0, 64], sizes = [8, 32], strides = [1, 1]} : vector<8x128xf32> to vector<8x32xf32>
    %153 = arith.mulf %150, %114 : vector<8x32xf32>
    %154 = arith.mulf %149, %152 : vector<8x32xf32>
    %155 = arith.addf %153, %154 : vector<8x32xf32>
    %156 = math.tanh %155 : vector<8x32xf32>
    %157 = arith.mulf %151, %156 : vector<8x32xf32>
    %158 = arith.truncf %157 : vector<8x32xf32> to vector<8x32xbf16>
    %cst_26 = arith.constant dense<0.000000e+00> : vector<8x128xf32>
    %159 = tpu.matmul %158, %8, %cst_26 {dimension_numbers = #tpu.dot_dimension_numbers<[1], [0], [0], [1], [0, 0, 1, 1], [], []>} : vector<8x32xbf16>, vector<32x128xbf16>, vector<8x128xf32> -> vector<8x128xf32>
    %cst_27 = arith.constant dense<0.000000e+00> : vector<8x128xf32>
    %160 = tpu.matmul %138, %9, %cst_27 {dimension_numbers = #tpu.dot_dimension_numbers<[1], [0], [0], [1], [0, 0, 1, 1], [], []>} : vector<8x32xbf16>, vector<32x128xbf16>, vector<8x128xf32> -> vector<8x128xf32>
    %161 = arith.addf %159, %160 : vector<8x128xf32>
    %162 = vector.broadcast %2 : vector<1x128xf32> to vector<8x128xf32>
    %163 = arith.addf %161, %162 : vector<8x128xf32>
    %164 = arith.negf %163 : vector<8x128xf32>
    %165 = math.exp %164 : vector<8x128xf32>
    %cst_28 = arith.constant 1.000000e+00 : f32
    %166 = vector.broadcast %cst_28 : f32 to vector<8x128xf32>
    %167 = arith.addf %166, %165 : vector<8x128xf32>
    %168 = arith.divf %166, %167 : vector<8x128xf32>
    %169 = math.tanh %163 : vector<8x128xf32>
    %170 = vector.extract_strided_slice %168 {offsets = [0, 0], sizes = [8, 32], strides = [1, 1]} : vector<8x128xf32> to vector<8x32xf32>
    %171 = vector.extract_strided_slice %168 {offsets = [0, 32], sizes = [8, 32], strides = [1, 1]} : vector<8x128xf32> to vector<8x32xf32>
    %172 = vector.extract_strided_slice %168 {offsets = [0, 96], sizes = [8, 32], strides = [1, 1]} : vector<8x128xf32> to vector<8x32xf32>
    %173 = vector.extract_strided_slice %169 {offsets = [0, 64], sizes = [8, 32], strides = [1, 1]} : vector<8x128xf32> to vector<8x32xf32>
    %174 = arith.mulf %171, %135 : vector<8x32xf32>
    %175 = arith.mulf %170, %173 : vector<8x32xf32>
    %176 = arith.addf %174, %175 : vector<8x32xf32>
    %177 = math.tanh %176 : vector<8x32xf32>
    %178 = arith.mulf %172, %177 : vector<8x32xf32>
    %179 = arith.truncf %178 : vector<8x32xf32> to vector<8x32xbf16>
    %180 = arith.addf %139, %178 : vector<8x32xf32>
    %181 = vector.extract_strided_slice %13 {offsets = [32, 0], sizes = [8, 128], strides = [1, 1]} : vector<64x128xf32> to vector<8x128xf32>
    %cst_29 = arith.constant dense<0.000000e+00> : vector<8x128xf32>
    %182 = tpu.matmul %158, %7, %cst_29 {dimension_numbers = #tpu.dot_dimension_numbers<[1], [0], [0], [1], [0, 0, 1, 1], [], []>} : vector<8x32xbf16>, vector<32x128xbf16>, vector<8x128xf32> -> vector<8x128xf32>
    %183 = arith.addf %181, %182 : vector<8x128xf32>
    %184 = arith.negf %183 : vector<8x128xf32>
    %185 = math.exp %184 : vector<8x128xf32>
    %cst_30 = arith.constant 1.000000e+00 : f32
    %186 = vector.broadcast %cst_30 : f32 to vector<8x128xf32>
    %187 = arith.addf %186, %185 : vector<8x128xf32>
    %188 = arith.divf %186, %187 : vector<8x128xf32>
    %189 = math.tanh %183 : vector<8x128xf32>
    %190 = vector.extract_strided_slice %188 {offsets = [0, 0], sizes = [8, 32], strides = [1, 1]} : vector<8x128xf32> to vector<8x32xf32>
    %191 = vector.extract_strided_slice %188 {offsets = [0, 32], sizes = [8, 32], strides = [1, 1]} : vector<8x128xf32> to vector<8x32xf32>
    %192 = vector.extract_strided_slice %188 {offsets = [0, 96], sizes = [8, 32], strides = [1, 1]} : vector<8x128xf32> to vector<8x32xf32>
    %193 = vector.extract_strided_slice %189 {offsets = [0, 64], sizes = [8, 32], strides = [1, 1]} : vector<8x128xf32> to vector<8x32xf32>
    %194 = arith.mulf %191, %155 : vector<8x32xf32>
    %195 = arith.mulf %190, %193 : vector<8x32xf32>
    %196 = arith.addf %194, %195 : vector<8x32xf32>
    %197 = math.tanh %196 : vector<8x32xf32>
    %198 = arith.mulf %192, %197 : vector<8x32xf32>
    %199 = arith.truncf %198 : vector<8x32xf32> to vector<8x32xbf16>
    %cst_31 = arith.constant dense<0.000000e+00> : vector<8x128xf32>
    %200 = tpu.matmul %199, %8, %cst_31 {dimension_numbers = #tpu.dot_dimension_numbers<[1], [0], [0], [1], [0, 0, 1, 1], [], []>} : vector<8x32xbf16>, vector<32x128xbf16>, vector<8x128xf32> -> vector<8x128xf32>
    %cst_32 = arith.constant dense<0.000000e+00> : vector<8x128xf32>
    %201 = tpu.matmul %179, %9, %cst_32 {dimension_numbers = #tpu.dot_dimension_numbers<[1], [0], [0], [1], [0, 0, 1, 1], [], []>} : vector<8x32xbf16>, vector<32x128xbf16>, vector<8x128xf32> -> vector<8x128xf32>
    %202 = arith.addf %200, %201 : vector<8x128xf32>
    %203 = vector.broadcast %2 : vector<1x128xf32> to vector<8x128xf32>
    %204 = arith.addf %202, %203 : vector<8x128xf32>
    %205 = arith.negf %204 : vector<8x128xf32>
    %206 = math.exp %205 : vector<8x128xf32>
    %cst_33 = arith.constant 1.000000e+00 : f32
    %207 = vector.broadcast %cst_33 : f32 to vector<8x128xf32>
    %208 = arith.addf %207, %206 : vector<8x128xf32>
    %209 = arith.divf %207, %208 : vector<8x128xf32>
    %210 = math.tanh %204 : vector<8x128xf32>
    %211 = vector.extract_strided_slice %209 {offsets = [0, 0], sizes = [8, 32], strides = [1, 1]} : vector<8x128xf32> to vector<8x32xf32>
    %212 = vector.extract_strided_slice %209 {offsets = [0, 32], sizes = [8, 32], strides = [1, 1]} : vector<8x128xf32> to vector<8x32xf32>
    %213 = vector.extract_strided_slice %209 {offsets = [0, 96], sizes = [8, 32], strides = [1, 1]} : vector<8x128xf32> to vector<8x32xf32>
    %214 = vector.extract_strided_slice %210 {offsets = [0, 64], sizes = [8, 32], strides = [1, 1]} : vector<8x128xf32> to vector<8x32xf32>
    %215 = arith.mulf %212, %176 : vector<8x32xf32>
    %216 = arith.mulf %211, %214 : vector<8x32xf32>
    %217 = arith.addf %215, %216 : vector<8x32xf32>
    %218 = math.tanh %217 : vector<8x32xf32>
    %219 = arith.mulf %213, %218 : vector<8x32xf32>
    %220 = arith.truncf %219 : vector<8x32xf32> to vector<8x32xbf16>
    %221 = arith.addf %180, %219 : vector<8x32xf32>
    %222 = vector.extract_strided_slice %13 {offsets = [40, 0], sizes = [8, 128], strides = [1, 1]} : vector<64x128xf32> to vector<8x128xf32>
    %cst_34 = arith.constant dense<0.000000e+00> : vector<8x128xf32>
    %223 = tpu.matmul %199, %7, %cst_34 {dimension_numbers = #tpu.dot_dimension_numbers<[1], [0], [0], [1], [0, 0, 1, 1], [], []>} : vector<8x32xbf16>, vector<32x128xbf16>, vector<8x128xf32> -> vector<8x128xf32>
    %224 = arith.addf %222, %223 : vector<8x128xf32>
    %225 = arith.negf %224 : vector<8x128xf32>
    %226 = math.exp %225 : vector<8x128xf32>
    %cst_35 = arith.constant 1.000000e+00 : f32
    %227 = vector.broadcast %cst_35 : f32 to vector<8x128xf32>
    %228 = arith.addf %227, %226 : vector<8x128xf32>
    %229 = arith.divf %227, %228 : vector<8x128xf32>
    %230 = math.tanh %224 : vector<8x128xf32>
    %231 = vector.extract_strided_slice %229 {offsets = [0, 0], sizes = [8, 32], strides = [1, 1]} : vector<8x128xf32> to vector<8x32xf32>
    %232 = vector.extract_strided_slice %229 {offsets = [0, 32], sizes = [8, 32], strides = [1, 1]} : vector<8x128xf32> to vector<8x32xf32>
    %233 = vector.extract_strided_slice %229 {offsets = [0, 96], sizes = [8, 32], strides = [1, 1]} : vector<8x128xf32> to vector<8x32xf32>
    %234 = vector.extract_strided_slice %230 {offsets = [0, 64], sizes = [8, 32], strides = [1, 1]} : vector<8x128xf32> to vector<8x32xf32>
    %235 = arith.mulf %232, %196 : vector<8x32xf32>
    %236 = arith.mulf %231, %234 : vector<8x32xf32>
    %237 = arith.addf %235, %236 : vector<8x32xf32>
    %238 = math.tanh %237 : vector<8x32xf32>
    %239 = arith.mulf %233, %238 : vector<8x32xf32>
    %240 = arith.truncf %239 : vector<8x32xf32> to vector<8x32xbf16>
    %cst_36 = arith.constant dense<0.000000e+00> : vector<8x128xf32>
    %241 = tpu.matmul %240, %8, %cst_36 {dimension_numbers = #tpu.dot_dimension_numbers<[1], [0], [0], [1], [0, 0, 1, 1], [], []>} : vector<8x32xbf16>, vector<32x128xbf16>, vector<8x128xf32> -> vector<8x128xf32>
    %cst_37 = arith.constant dense<0.000000e+00> : vector<8x128xf32>
    %242 = tpu.matmul %220, %9, %cst_37 {dimension_numbers = #tpu.dot_dimension_numbers<[1], [0], [0], [1], [0, 0, 1, 1], [], []>} : vector<8x32xbf16>, vector<32x128xbf16>, vector<8x128xf32> -> vector<8x128xf32>
    %243 = arith.addf %241, %242 : vector<8x128xf32>
    %244 = vector.broadcast %2 : vector<1x128xf32> to vector<8x128xf32>
    %245 = arith.addf %243, %244 : vector<8x128xf32>
    %246 = arith.negf %245 : vector<8x128xf32>
    %247 = math.exp %246 : vector<8x128xf32>
    %cst_38 = arith.constant 1.000000e+00 : f32
    %248 = vector.broadcast %cst_38 : f32 to vector<8x128xf32>
    %249 = arith.addf %248, %247 : vector<8x128xf32>
    %250 = arith.divf %248, %249 : vector<8x128xf32>
    %251 = math.tanh %245 : vector<8x128xf32>
    %252 = vector.extract_strided_slice %250 {offsets = [0, 0], sizes = [8, 32], strides = [1, 1]} : vector<8x128xf32> to vector<8x32xf32>
    %253 = vector.extract_strided_slice %250 {offsets = [0, 32], sizes = [8, 32], strides = [1, 1]} : vector<8x128xf32> to vector<8x32xf32>
    %254 = vector.extract_strided_slice %250 {offsets = [0, 96], sizes = [8, 32], strides = [1, 1]} : vector<8x128xf32> to vector<8x32xf32>
    %255 = vector.extract_strided_slice %251 {offsets = [0, 64], sizes = [8, 32], strides = [1, 1]} : vector<8x128xf32> to vector<8x32xf32>
    %256 = arith.mulf %253, %217 : vector<8x32xf32>
    %257 = arith.mulf %252, %255 : vector<8x32xf32>
    %258 = arith.addf %256, %257 : vector<8x32xf32>
    %259 = math.tanh %258 : vector<8x32xf32>
    %260 = arith.mulf %254, %259 : vector<8x32xf32>
    %261 = arith.truncf %260 : vector<8x32xf32> to vector<8x32xbf16>
    %262 = arith.addf %221, %260 : vector<8x32xf32>
    %263 = vector.extract_strided_slice %13 {offsets = [48, 0], sizes = [8, 128], strides = [1, 1]} : vector<64x128xf32> to vector<8x128xf32>
    %cst_39 = arith.constant dense<0.000000e+00> : vector<8x128xf32>
    %264 = tpu.matmul %240, %7, %cst_39 {dimension_numbers = #tpu.dot_dimension_numbers<[1], [0], [0], [1], [0, 0, 1, 1], [], []>} : vector<8x32xbf16>, vector<32x128xbf16>, vector<8x128xf32> -> vector<8x128xf32>
    %265 = arith.addf %263, %264 : vector<8x128xf32>
    %266 = arith.negf %265 : vector<8x128xf32>
    %267 = math.exp %266 : vector<8x128xf32>
    %cst_40 = arith.constant 1.000000e+00 : f32
    %268 = vector.broadcast %cst_40 : f32 to vector<8x128xf32>
    %269 = arith.addf %268, %267 : vector<8x128xf32>
    %270 = arith.divf %268, %269 : vector<8x128xf32>
    %271 = math.tanh %265 : vector<8x128xf32>
    %272 = vector.extract_strided_slice %270 {offsets = [0, 0], sizes = [8, 32], strides = [1, 1]} : vector<8x128xf32> to vector<8x32xf32>
    %273 = vector.extract_strided_slice %270 {offsets = [0, 32], sizes = [8, 32], strides = [1, 1]} : vector<8x128xf32> to vector<8x32xf32>
    %274 = vector.extract_strided_slice %270 {offsets = [0, 96], sizes = [8, 32], strides = [1, 1]} : vector<8x128xf32> to vector<8x32xf32>
    %275 = vector.extract_strided_slice %271 {offsets = [0, 64], sizes = [8, 32], strides = [1, 1]} : vector<8x128xf32> to vector<8x32xf32>
    %276 = arith.mulf %273, %237 : vector<8x32xf32>
    %277 = arith.mulf %272, %275 : vector<8x32xf32>
    %278 = arith.addf %276, %277 : vector<8x32xf32>
    %279 = math.tanh %278 : vector<8x32xf32>
    %280 = arith.mulf %274, %279 : vector<8x32xf32>
    %281 = arith.truncf %280 : vector<8x32xf32> to vector<8x32xbf16>
    %cst_41 = arith.constant dense<0.000000e+00> : vector<8x128xf32>
    %282 = tpu.matmul %281, %8, %cst_41 {dimension_numbers = #tpu.dot_dimension_numbers<[1], [0], [0], [1], [0, 0, 1, 1], [], []>} : vector<8x32xbf16>, vector<32x128xbf16>, vector<8x128xf32> -> vector<8x128xf32>
    %cst_42 = arith.constant dense<0.000000e+00> : vector<8x128xf32>
    %283 = tpu.matmul %261, %9, %cst_42 {dimension_numbers = #tpu.dot_dimension_numbers<[1], [0], [0], [1], [0, 0, 1, 1], [], []>} : vector<8x32xbf16>, vector<32x128xbf16>, vector<8x128xf32> -> vector<8x128xf32>
    %284 = arith.addf %282, %283 : vector<8x128xf32>
    %285 = vector.broadcast %2 : vector<1x128xf32> to vector<8x128xf32>
    %286 = arith.addf %284, %285 : vector<8x128xf32>
    %287 = arith.negf %286 : vector<8x128xf32>
    %288 = math.exp %287 : vector<8x128xf32>
    %cst_43 = arith.constant 1.000000e+00 : f32
    %289 = vector.broadcast %cst_43 : f32 to vector<8x128xf32>
    %290 = arith.addf %289, %288 : vector<8x128xf32>
    %291 = arith.divf %289, %290 : vector<8x128xf32>
    %292 = math.tanh %286 : vector<8x128xf32>
    %293 = vector.extract_strided_slice %291 {offsets = [0, 0], sizes = [8, 32], strides = [1, 1]} : vector<8x128xf32> to vector<8x32xf32>
    %294 = vector.extract_strided_slice %291 {offsets = [0, 32], sizes = [8, 32], strides = [1, 1]} : vector<8x128xf32> to vector<8x32xf32>
    %295 = vector.extract_strided_slice %291 {offsets = [0, 96], sizes = [8, 32], strides = [1, 1]} : vector<8x128xf32> to vector<8x32xf32>
    %296 = vector.extract_strided_slice %292 {offsets = [0, 64], sizes = [8, 32], strides = [1, 1]} : vector<8x128xf32> to vector<8x32xf32>
    %297 = arith.mulf %294, %258 : vector<8x32xf32>
    %298 = arith.mulf %293, %296 : vector<8x32xf32>
    %299 = arith.addf %297, %298 : vector<8x32xf32>
    %300 = math.tanh %299 : vector<8x32xf32>
    %301 = arith.mulf %295, %300 : vector<8x32xf32>
    %302 = arith.truncf %301 : vector<8x32xf32> to vector<8x32xbf16>
    %303 = arith.addf %262, %301 : vector<8x32xf32>
    %304 = vector.extract_strided_slice %13 {offsets = [56, 0], sizes = [8, 128], strides = [1, 1]} : vector<64x128xf32> to vector<8x128xf32>
    %cst_44 = arith.constant dense<0.000000e+00> : vector<8x128xf32>
    %305 = tpu.matmul %281, %7, %cst_44 {dimension_numbers = #tpu.dot_dimension_numbers<[1], [0], [0], [1], [0, 0, 1, 1], [], []>} : vector<8x32xbf16>, vector<32x128xbf16>, vector<8x128xf32> -> vector<8x128xf32>
    %306 = arith.addf %304, %305 : vector<8x128xf32>
    %307 = arith.negf %306 : vector<8x128xf32>
    %308 = math.exp %307 : vector<8x128xf32>
    %cst_45 = arith.constant 1.000000e+00 : f32
    %309 = vector.broadcast %cst_45 : f32 to vector<8x128xf32>
    %310 = arith.addf %309, %308 : vector<8x128xf32>
    %311 = arith.divf %309, %310 : vector<8x128xf32>
    %312 = math.tanh %306 : vector<8x128xf32>
    %313 = vector.extract_strided_slice %311 {offsets = [0, 0], sizes = [8, 32], strides = [1, 1]} : vector<8x128xf32> to vector<8x32xf32>
    %314 = vector.extract_strided_slice %311 {offsets = [0, 32], sizes = [8, 32], strides = [1, 1]} : vector<8x128xf32> to vector<8x32xf32>
    %315 = vector.extract_strided_slice %311 {offsets = [0, 96], sizes = [8, 32], strides = [1, 1]} : vector<8x128xf32> to vector<8x32xf32>
    %316 = vector.extract_strided_slice %312 {offsets = [0, 64], sizes = [8, 32], strides = [1, 1]} : vector<8x128xf32> to vector<8x32xf32>
    %317 = arith.mulf %314, %278 : vector<8x32xf32>
    %318 = arith.mulf %313, %316 : vector<8x32xf32>
    %319 = arith.addf %317, %318 : vector<8x32xf32>
    %320 = math.tanh %319 : vector<8x32xf32>
    %321 = arith.mulf %315, %320 : vector<8x32xf32>
    %322 = arith.truncf %321 : vector<8x32xf32> to vector<8x32xbf16>
    %cst_46 = arith.constant dense<0.000000e+00> : vector<8x128xf32>
    %323 = tpu.matmul %322, %8, %cst_46 {dimension_numbers = #tpu.dot_dimension_numbers<[1], [0], [0], [1], [0, 0, 1, 1], [], []>} : vector<8x32xbf16>, vector<32x128xbf16>, vector<8x128xf32> -> vector<8x128xf32>
    %cst_47 = arith.constant dense<0.000000e+00> : vector<8x128xf32>
    %324 = tpu.matmul %302, %9, %cst_47 {dimension_numbers = #tpu.dot_dimension_numbers<[1], [0], [0], [1], [0, 0, 1, 1], [], []>} : vector<8x32xbf16>, vector<32x128xbf16>, vector<8x128xf32> -> vector<8x128xf32>
    %325 = arith.addf %323, %324 : vector<8x128xf32>
    %326 = vector.broadcast %2 : vector<1x128xf32> to vector<8x128xf32>
    %327 = arith.addf %325, %326 : vector<8x128xf32>
    %328 = arith.negf %327 : vector<8x128xf32>
    %329 = math.exp %328 : vector<8x128xf32>
    %cst_48 = arith.constant 1.000000e+00 : f32
    %330 = vector.broadcast %cst_48 : f32 to vector<8x128xf32>
    %331 = arith.addf %330, %329 : vector<8x128xf32>
    %332 = arith.divf %330, %331 : vector<8x128xf32>
    %333 = math.tanh %327 : vector<8x128xf32>
    %334 = vector.extract_strided_slice %332 {offsets = [0, 0], sizes = [8, 32], strides = [1, 1]} : vector<8x128xf32> to vector<8x32xf32>
    %335 = vector.extract_strided_slice %332 {offsets = [0, 32], sizes = [8, 32], strides = [1, 1]} : vector<8x128xf32> to vector<8x32xf32>
    %336 = vector.extract_strided_slice %332 {offsets = [0, 96], sizes = [8, 32], strides = [1, 1]} : vector<8x128xf32> to vector<8x32xf32>
    %337 = vector.extract_strided_slice %333 {offsets = [0, 64], sizes = [8, 32], strides = [1, 1]} : vector<8x128xf32> to vector<8x32xf32>
    %338 = arith.mulf %335, %299 : vector<8x32xf32>
    %339 = arith.mulf %334, %337 : vector<8x32xf32>
    %340 = arith.addf %338, %339 : vector<8x32xf32>
    %341 = math.tanh %340 : vector<8x32xf32>
    %342 = arith.mulf %336, %341 : vector<8x32xf32>
    %343 = arith.addf %303, %342 : vector<8x32xf32>
    %c112 = arith.constant 112 : index
    %c0_49 = arith.constant 0 : index
    %344 = vector.load %arg3[%c112, %c0_49] : memref<400x128xbf16, #tpu.memory_space<vmem>>, vector<32x128xbf16>
    %c144 = arith.constant 144 : index
    %c0_50 = arith.constant 0 : index
    %345 = vector.load %arg3[%c144, %c0_50] : memref<400x128xbf16, #tpu.memory_space<vmem>>, vector<128x128xbf16>
    %c272 = arith.constant 272 : index
    %c0_51 = arith.constant 0 : index
    %346 = vector.load %arg3[%c272, %c0_51] : memref<400x128xbf16, #tpu.memory_space<vmem>>, vector<128x128xbf16>
    %347 = arith.truncf %343 : vector<8x32xf32> to vector<8x32xbf16>
    %cst_52 = arith.constant dense<0.000000e+00> : vector<8x128xf32>
    %348 = tpu.matmul %347, %344, %cst_52 {dimension_numbers = #tpu.dot_dimension_numbers<[1], [0], [0], [1], [0, 0, 1, 1], [], []>} : vector<8x32xbf16>, vector<32x128xbf16>, vector<8x128xf32> -> vector<8x128xf32>
    %c0_53 = arith.constant 0 : index
    %c0_54 = arith.constant 0 : index
    %349 = vector.load %arg2[%c0_53, %c0_54] : memref<8x128xf32, #tpu.memory_space<vmem>>, vector<8x128xf32>
    %350 = arith.addf %348, %349 : vector<8x128xf32>
    %cst_55 = arith.constant 0.000000e+00 : f32
    %351 = vector.broadcast %cst_55 : f32 to vector<8x128xf32>
    %352 = arith.maximumf %350, %351 : vector<8x128xf32>
    %353 = arith.truncf %352 : vector<8x128xf32> to vector<8x128xbf16>
    %cst_56 = arith.constant dense<0.000000e+00> : vector<8x128xf32>
    %354 = tpu.matmul %353, %345, %cst_56 {dimension_numbers = #tpu.dot_dimension_numbers<[1], [0], [0], [1], [0, 0, 1, 1], [], []>} : vector<8x128xbf16>, vector<128x128xbf16>, vector<8x128xf32> -> vector<8x128xf32>
    %355 = vector.broadcast %3 : vector<1x128xf32> to vector<8x128xf32>
    %356 = arith.addf %354, %355 : vector<8x128xf32>
    %cst_57 = arith.constant 0.000000e+00 : f32
    %357 = vector.broadcast %cst_57 : f32 to vector<8x128xf32>
    %358 = arith.maximumf %356, %357 : vector<8x128xf32>
    %359 = arith.truncf %358 : vector<8x128xf32> to vector<8x128xbf16>
    %cst_58 = arith.constant dense<0.000000e+00> : vector<8x128xf32>
    %360 = tpu.matmul %359, %346, %cst_58 {dimension_numbers = #tpu.dot_dimension_numbers<[1], [0], [0], [1], [0, 0, 1, 1], [], []>} : vector<8x128xbf16>, vector<128x128xbf16>, vector<8x128xf32> -> vector<8x128xf32>
    %361 = vector.broadcast %4 : vector<1x128xf32> to vector<8x128xf32>
    %362 = arith.addf %360, %361 : vector<8x128xf32>
    %cst_59 = arith.constant 0.000000e+00 : f32
    %363 = vector.broadcast %cst_59 : f32 to vector<8x128xf32>
    %364 = arith.maximumf %362, %363 : vector<8x128xf32>
    %365 = vector.broadcast %5 : vector<1x128xf32> to vector<8x128xf32>
    %366 = arith.mulf %364, %365 : vector<8x128xf32>
    %cst_60 = arith.constant dense<0.000000e+00> : vector<8xf32>
    %367 = vector.multi_reduction <add>, %366, %cst_60 [1] : vector<8x128xf32> to vector<8xf32>
    %368 = vector.shape_cast %367 : vector<8xf32> to vector<8x1xf32>
    %c0_61 = arith.constant 0 : index
    %c0_62 = arith.constant 0 : index
    %369 = vector.load %arg5[%c0_61, %c0_62] : memref<8x1xf32, #tpu.memory_space<vmem>>, vector<8x1xf32>
    tpu.vector_store %arg5[%c0_61, %c0_62], %368 {strides = array<i32>} : memref<8x1xf32, #tpu.memory_space<vmem>>, vector<8x1xf32>,
    return
  }
  func.func @transform_0(%arg0: i32) -> (i32, i32) {
    %c0_i32 = arith.constant 0 : i32
    %c0_i32_0 = arith.constant 0 : i32
    return %arg0, %c0_i32 : i32, i32
  }
  func.func @transform_1(%arg0: i32) -> (i32, i32) {
    %c0_i32 = arith.constant 0 : i32
    %c0_i32_0 = arith.constant 0 : i32
    return %arg0, %c0_i32 : i32, i32
  }
  func.func @transform_2(%arg0: i32) -> (i32, i32) {
    %c0_i32 = arith.constant 0 : i32
    %c0_i32_0 = arith.constant 0 : i32
    %c0_i32_1 = arith.constant 0 : i32
    return %c0_i32, %c0_i32_0 : i32, i32
  }
  func.func @transform_3(%arg0: i32) -> (i32, i32) {
    %c0_i32 = arith.constant 0 : i32
    %c0_i32_0 = arith.constant 0 : i32
    %c0_i32_1 = arith.constant 0 : i32
    return %c0_i32, %c0_i32_0 : i32, i32
  }
  func.func @transform_4(%arg0: i32) -> (i32, i32) {
    %c0_i32 = arith.constant 0 : i32
    %c0_i32_0 = arith.constant 0 : i32
    return %arg0, %c0_i32 : i32, i32
  }
}

</mosaic_0001>

<llo_original>
// kernel: tpu_custom_call.1
$region0: #{tpu_custom_call.1}
  #allocation0 [shape = 'u32[]', space=smem, size = 0x4, offset = 0x4, fixed_abs, tag = 'smem constant byte address 0x4 - core index']
  #allocation1 [shape = 'u32[72,128]{1,0:T(1,128)}', space=vmem, size = 0x9000, scoped, tag = 'internal scratch']
  %s0 = inlined_call_operand.vmem [shape: bf16[64,8], index: 0, kind: input, shape index: {}]
  %s1 = inlined_call_operand.vmem [shape: f32[8,128], index: 1, kind: input, shape index: {}]
  %s2 = inlined_call_operand.hbm [shape: bf16[400,128], index: 2, kind: input, shape index: {}]
  %s3 = inlined_call_operand.vmem [shape: f32[8,128], index: 3, kind: input, shape index: {}]
  %s4 = inlined_call_operand.vmem [shape: f32[8,1], index: 4, kind: output, shape index: {}]
  %s5 = sld [smem:[#allocation0]]
  $region30: #{tpu_custom_call.1} parent=0
    _
  %s7 = ssub.s32 1, %s5
  %s8 = scalar_select 0, %s7, %s5
  $region1: #{tpu_custom_call.1} parent=0
    #allocation2 [shape = 'u8[102400]{0}', space=vmem, size = 0x19000, scoped, tag = 'input window, operand 2, single buffered']
    #allocation3 [shape = 's32[1]{0}', space=sflag, size = 0x4, scoped, tag = 'scoped memory for tpu_custom_call.1']
    %9 = vsyncpa [#allocation3], 0
    // Predicated region
    $region2: #{tpu_custom_call.1} parent=1 // pred_check
      _
    $region3: #{tpu_custom_call.1} parent=1 // pred_check_branch
      %11 = sbr.rel (0) target = $region5
    $region4: #{tpu_custom_call.1} parent=1 // pred_region
      _
    $region5: #{tpu_custom_call.1} parent=1 // pred_fallthru
      _
    // Predicated region
    $region6: #{tpu_custom_call.1} parent=1 // pred_check
      _
    $region7: #{tpu_custom_call.1} parent=1 // pred_check_branch
      %13 = sbr.rel (0) target = $region9
    $region8: #{tpu_custom_call.1} parent=1 // pred_region
      _
    $region9: #{tpu_custom_call.1} parent=1 // pred_fallthru
      _
    // Predicated region
    $region10: #{tpu_custom_call.1} parent=1 // pred_check
      _
    $region11: #{tpu_custom_call.1} parent=1 // pred_check_branch
      %15 = sbr.rel (0) target = $region13
    $region12: #{tpu_custom_call.1} parent=1 // pred_region
      %17 = vsyncadd [#allocation3], 0
      %s18 = sshll.u32 %s2, 4
      %s19 = int_to_ptr.hbm [resolvable:$true] %s18
      %s20 = sshll.u32 [#allocation2], 4
      %s21 = int_to_ptr.vmem [resolvable:$true] %s20
      %26 = dma.hbm_to_vmem [thread:$0]  %s19, 3200, %s21, [#allocation3], 64, 64, 4
    $region13: #{tpu_custom_call.1} parent=1 // pred_fallthru
      _
    // Predicated region
    $region14: #{tpu_custom_call.1} parent=1 // pred_check
      _
    $region15: #{tpu_custom_call.1} parent=1 // pred_check_branch
      %28 = sbr.rel (0) target = $region17
    $region16: #{tpu_custom_call.1} parent=1 // pred_region
      _
    $region17: #{tpu_custom_call.1} parent=1 // pred_fallthru
      _
    // Predicated region
    $region18: #{tpu_custom_call.1} parent=1 // pred_check
      _
    $region19: #{tpu_custom_call.1} parent=1 // pred_check_branch
      %30 = sbr.rel (0) target = $region21
    $region20: #{tpu_custom_call.1} parent=1 // pred_region
      %32 = dma.done [#allocation3], 3200
    $region21: #{tpu_custom_call.1} parent=1 // pred_fallthru
      _
    %v34 = vld [vmem:[%s3] sm:$0xff]
    %v35 = vld [vmem:[#allocation2] sm:$0xf]
    %v36 = vld [vmem:[#allocation2 + $0x8] sm:$0xf]
    %v37 = vld [vmem:[#allocation2 + $0xc] sm:$0xf]
    %v38 = vld [vmem:[#allocation2 + $0x10] sm:$0xf]
    %v39 = vld [vmem:[#allocation2 + $0x14] sm:$0xf]
    %v40 = vld [vmem:[#allocation2 + $0x18] sm:$0xf]
    %v41 = vld [vmem:[#allocation2 + $0x1c] sm:$0xf]
    %v42 = vld [vmem:[#allocation2 + $0x20] sm:$0xf]
    %v43 = vld [vmem:[#allocation2 + $0x24] sm:$0xf]
    %v44 = vld [vmem:[#allocation2 + $0x28] sm:$0xf]
    %v45 = vld [vmem:[#allocation2 + $0x2c] sm:$0xf]
    %v46 = vld [vmem:[#allocation2 + $0x30] sm:$0xf]
    %v47 = vld [vmem:[#allocation2 + $0x34] sm:$0xf]
    %v48 = vld [vmem:[%s0] sm:$0xf]
    %v49 = vld [vmem:[%s0 + $0x4] sm:$0xf]
    %v50 = vld [vmem:[%s0 + $0x8] sm:$0xf]
    %v51 = vld [vmem:[%s0 + $0xc] sm:$0xf]
    %v52 = vld [vmem:[%s0 + $0x10] sm:$0xf]
    %v53 = vld [vmem:[%s0 + $0x14] sm:$0xf]
    %v54 = vld [vmem:[%s0 + $0x18] sm:$0xf]
    %v55 = vld [vmem:[%s0 + $0x1c] sm:$0xf]
    %v56 = vperm.slane %v34, 0
    %v65 = vunpack.c.l.b16 %v48
    %v66 = vunpack.c.l.b16 %v49
    %v67 = vunpack.c.l.b16 %v50
    %v68 = vunpack.c.l.b16 %v51
    %v69 = vunpack.c.l.b16 %v52
    %v70 = vunpack.c.l.b16 %v53
    %v71 = vunpack.c.l.b16 %v54
    %v72 = vunpack.c.l.b16 %v55
    %v73 = vpack.c.b16 %v66, %v65
    %v74 = vpack.c.b16 %v68, %v67
    %v75 = vpack.c.b16 %v70, %v69
    %v76 = vpack.c.b16 %v72, %v71
    %vm77 = vcmask 64512
    %v79 = vsel %vm77, %v73, 0
    %v82 = vsel %vm77, %v74, 0
    %v85 = vsel %vm77, %v75, 0
    %v88 = vsel %vm77, %v76, 0
    %vm90 = vcmask 1043456
    %v92 = vsel %vm90, %v35, 0
    %94 = vmatpush.bf16.msra.mxu0 0
    %95 = vmatpush.bf16.msra.mxu0 0
    %96 = vmatpush.bf16.msra.mxu0 0
    %97 = vmatpush.bf16.msra.mxu0 0
    %98 = vmatpush.bf16.msra.mxu0 0
    %99 = vmatpush.bf16.msra.mxu0 0
    %100 = vmatpush.bf16.msra.mxu0 0
    %101 = vmatpush.bf16.msra.mxu0 %v92
    %102 = vmatmul.bf16.gmra.mxu0 %v79
    %v103 = vpop.f32.mrf.mxu0
    %v104 = vadd.f32 %v56, %v103
    %v105 = vpop.f32.mrf.mxu0
    %v106 = vadd.f32 %v56, %v105
    %107 = vmatmul.bf16.gmra.mxu0 %v82
    %v108 = vpop.f32.mrf.mxu0
    %v109 = vadd.f32 %v56, %v108
    %v110 = vpop.f32.mrf.mxu0
    %v111 = vadd.f32 %v56, %v110
    %112 = vmatmul.bf16.gmra.mxu0 %v85
    %v113 = vpop.f32.mrf.mxu0
    %v114 = vadd.f32 %v56, %v113
    %v115 = vpop.f32.mrf.mxu0
    %v116 = vadd.f32 %v56, %v115
    %117 = vmatmul.bf16.gmra.mxu0 %v88
    %v118 = vpop.f32.mrf.mxu0
    %v119 = vadd.f32 %v56, %v118
    %v120 = vpop.f32.mrf.mxu0
    %v121 = vadd.f32 %v56, %v120
    %122 = vdwg.mxu0
    %v127 = vunpack.c.l.b16 %v36
    %v128 = vunpack.c.l.b16 %v37
    %v129 = vunpack.c.l.b16 %v38
    %v130 = vunpack.c.l.b16 %v39
    %v131 = vpack.c.b16 %v128, %v127
    %v132 = vpack.c.b16 %v130, %v129
    %vm135 = vcmask 261120
    %v137 = vsel %vm135, 0, 0
    %139 = vmatpush.bf16.msra.mxu0 0
    %140 = vmatpush.bf16.msra.mxu0 0
    %141 = vmatpush.bf16.msra.mxu0 0
    %142 = vmatpush.bf16.msra.mxu0 0
    %143 = vmatpush.bf16.msra.mxu0 0
    %144 = vmatpush.bf16.msra.mxu0 0
    %145 = vmatpush.bf16.msra.mxu0 %v132
    %146 = vmatpush.bf16.msra.mxu0 %v131
    %147 = vmatmul.bf16.gmra.mxu0 %v137
    %v148 = vpop.f32.mrf.mxu0
    %v149 = vadd.f32 0.0, %v148
    %v150 = vpop.f32.mrf.mxu0
    %151 = vdwg.mxu0
    %v152 = vadd.f32 %v104, %v149
    %v153 = vxor.u32 %v152, 2147483648
    %v154 = vmul.f32 %v153, 1.442695
    %v155 = vpow.pop %v154
    %v156 = vadd.f32 %v155, 1.0
    %v157 = vrcp.pop %v156
    %v158 = vmul.f32 %v156, %v157
    %v159 = vsub.f32 1.0, %v158
    %v160 = vmul.f32 %v157, %v159
    %v161 = vadd.f32 %v157, %v160
    %vm162 = vweird.f32 %v156
    %vm163 = vweird.f32 %v157
    %vm164 = vmor %vm162, %vm163
    %v165 = vsel %vm164, %v157, %v161
    %v166 = vand.u32 2147483647, %v156
    %vm167 = vcmp.eq.f32.partialorder %v166, 8.507059e+37
    %v168 = vand.u32 %v156, 2147483648
    %v169 = vor.u32 1.1754944e-38, %v168
    %v170 = vsel %vm167, %v169, %v165
    %v171 = vmul.f32 1.0, %v170
    %v172 = vtanh.pop %v152
    %v173 = vmul.f32 %v171, 0.0
    %175 = vrot.lane.b32.xlu0 %v172, 64
    %v176 = vpop.permute.xlu0 %175
    %v178 = vmul.f32 %v171, %v176
    %180 = vrot.lane.b32.xlu0 %v178, 32
    %v181 = vpop.permute.xlu0 %180
    %v183 = vadd.f32 %v173, %v181
    %v184 = vtanh.pop %v183
    %186 = vrot.lane.b32.xlu0 %v184, 64
    %v187 = vpop.permute.xlu0 %186
    %v189 = vmul.f32 %v171, %v187
    %v190 = vpack.c.bf16 %v189, %v189
    %v195 = vunpack.c.l.b16 %v44
    %v196 = vunpack.c.l.b16 %v45
    %v197 = vunpack.c.l.b16 %v46
    %v198 = vunpack.c.l.b16 %v47
    %v199 = vpack.c.b16 %v196, %v195
    %v200 = vpack.c.b16 %v198, %v197
    %203 = vmatpush.bf16.msra.mxu0 0
    %204 = vmatpush.bf16.msra.mxu0 0
    %205 = vmatpush.bf16.msra.mxu0 0
    %206 = vmatpush.bf16.msra.mxu0 0
    %207 = vmatpush.bf16.msra.mxu0 0
    %208 = vmatpush.bf16.msra.mxu0 0
    %209 = vmatpush.bf16.msra.mxu0 %v200
    %210 = vmatpush.bf16.msra.mxu0 %v199
    %211 = vmatmul.bf16.gmra.mxu0 %v137
    %v212 = vpop.f32.mrf.mxu0
    %v213 = vadd.f32 0.0, %v212
    %v214 = vpop.f32.mrf.mxu0
    %215 = vdwg.mxu0
    %217 = vrot.lane.b32.xlu0 %v190, 32
    %v218 = vpop.permute.xlu0 %217
    %v223 = vunpack.c.l.b16 %v40
    %v224 = vunpack.c.l.b16 %v41
    %v225 = vunpack.c.l.b16 %v42
    %v226 = vunpack.c.l.b16 %v43
    %v227 = vpack.c.b16 %v224, %v223
    %v228 = vpack.c.b16 %v226, %v225
    %v232 = vsel %vm135, %v218, 0
    %234 = vmatpush.bf16.msra.mxu0 0
    %235 = vmatpush.bf16.msra.mxu0 0
    %236 = vmatpush.bf16.msra.mxu0 0
    %237 = vmatpush.bf16.msra.mxu0 0
    %238 = vmatpush.bf16.msra.mxu0 0
    %239 = vmatpush.bf16.msra.mxu0 0
    %240 = vmatpush.bf16.msra.mxu0 %v228
    %241 = vmatpush.bf16.msra.mxu0 %v227
    %242 = vmatmul.bf16.gmra.mxu0 %v232
    %v243 = vpop.f32.mrf.mxu0
    %v244 = vadd.f32 %v213, %v243
    %v245 = vpop.f32.mrf.mxu0
    %246 = vdwg.mxu0
    %v247 = vperm.slane %v34, 1
    %v248 = vadd.f32 %v244, %v247
    %v249 = vxor.u32 %v248, 2147483648
    %v250 = vmul.f32 %v249, 1.442695
    %v251 = vpow.pop %v250
    %v252 = vadd.f32 %v251, 1.0
    %v253 = vrcp.pop %v252
    %v254 = vmul.f32 %v252, %v253
    %v255 = vsub.f32 1.0, %v254
    %v256 = vmul.f32 %v253, %v255
    %v257 = vadd.f32 %v253, %v256
    %vm258 = vweird.f32 %v252
    %vm259 = vweird.f32 %v253
    %vm260 = vmor %vm258, %vm259
    %v261 = vsel %vm260, %v253, %v257
    %v262 = vand.u32 2147483647, %v252
    %vm263 = vcmp.eq.f32.partialorder %v262, 8.507059e+37
    %v264 = vand.u32 %v252, 2147483648
    %v265 = vor.u32 1.1754944e-38, %v264
    %v266 = vsel %vm263, %v265, %v261
    %v267 = vmul.f32 1.0, %v266
    %v268 = vtanh.pop %v248
    %v269 = vmul.f32 %v267, 0.0
    %271 = vrot.lane.b32.xlu0 %v268, 64
    %v272 = vpop.permute.xlu0 %271
    %v274 = vmul.f32 %v267, %v272
    %276 = vrot.lane.b32.xlu0 %v274, 32
    %v277 = vpop.permute.xlu0 %276
    %v279 = vadd.f32 %v269, %v277
    %v280 = vtanh.pop %v279
    %282 = vrot.lane.b32.xlu0 %v280, 64
    %v283 = vpop.permute.xlu0 %282
    %v285 = vmul.f32 %v267, %v283
    %v286 = vpack.c.bf16 %v285, %v285
    %v287 = vadd.f32 %v285, 0.0
    %288 = vmatpush.bf16.msra.mxu0 0
    %289 = vmatpush.bf16.msra.mxu0 0
    %290 = vmatpush.bf16.msra.mxu0 0
    %291 = vmatpush.bf16.msra.mxu0 0
    %292 = vmatpush.bf16.msra.mxu0 0
    %293 = vmatpush.bf16.msra.mxu0 0
    %294 = vmatpush.bf16.msra.mxu0 %v132
    %295 = vmatpush.bf16.msra.mxu0 %v131
    %296 = vmatmul.bf16.gmra.mxu0 %v232
    %v297 = vpop.f32.mrf.mxu0
    %v298 = vadd.f32 0.0, %v297
    %v299 = vpop.f32.mrf.mxu0
    %300 = vdwg.mxu0
    %v301 = vadd.f32 %v106, %v298
    %v302 = vxor.u32 %v301, 2147483648
    %v303 = vmul.f32 %v302, 1.442695
    %v304 = vpow.pop %v303
    %v305 = vadd.f32 %v304, 1.0
    %v306 = vrcp.pop %v305
    %v307 = vmul.f32 %v305, %v306
    %v308 = vsub.f32 1.0, %v307
    %v309 = vmul.f32 %v306, %v308
    %v310 = vadd.f32 %v306, %v309
    %vm311 = vweird.f32 %v305
    %vm312 = vweird.f32 %v306
    %vm313 = vmor %vm311, %vm312
    %v314 = vsel %vm313, %v306, %v310
    %v315 = vand.u32 2147483647, %v305
    %vm316 = vcmp.eq.f32.partialorder %v315, 8.507059e+37
    %v317 = vand.u32 %v305, 2147483648
    %v318 = vor.u32 1.1754944e-38, %v317
    %v319 = vsel %vm316, %v318, %v314
    %v320 = vmul.f32 1.0, %v319
    %v321 = vtanh.pop %v301
    %v322 = vmul.f32 %v320, %v183
    %324 = vrot.lane.b32.xlu0 %v321, 64
    %v325 = vpop.permute.xlu0 %324
    %v327 = vmul.f32 %v320, %v325
    %329 = vrot.lane.b32.xlu0 %v327, 32
    %v330 = vpop.permute.xlu0 %329
    %v332 = vadd.f32 %v322, %v330
    %v333 = vtanh.pop %v332
    %335 = vrot.lane.b32.xlu0 %v333, 64
    %v336 = vpop.permute.xlu0 %335
    %v338 = vmul.f32 %v320, %v336
    %v339 = vpack.c.bf16 %v338, %v338
    %341 = vrot.lane.b32.xlu0 %v286, 32
    %v342 = vpop.permute.xlu0 %341
    %v344 = vsel %vm135, %v342, 0
    %346 = vmatpush.bf16.msra.mxu0 0
    %347 = vmatpush.bf16.msra.mxu0 0
    %348 = vmatpush.bf16.msra.mxu0 0
    %349 = vmatpush.bf16.msra.mxu0 0
    %350 = vmatpush.bf16.msra.mxu0 0
    %351 = vmatpush.bf16.msra.mxu0 0
    %352 = vmatpush.bf16.msra.mxu0 %v200
    %353 = vmatpush.bf16.msra.mxu0 %v199
    %354 = vmatmul.bf16.gmra.mxu0 %v344
    %v355 = vpop.f32.mrf.mxu0
    %v356 = vadd.f32 0.0, %v355
    %v357 = vpop.f32.mrf.mxu0
    %358 = vdwg.mxu0
    %360 = vrot.lane.b32.xlu0 %v339, 32
    %v361 = vpop.permute.xlu0 %360
    %v363 = vsel %vm135, %v361, 0
    %365 = vmatpush.bf16.msra.mxu0 0
    %366 = vmatpush.bf16.msra.mxu0 0
    %367 = vmatpush.bf16.msra.mxu0 0
    %368 = vmatpush.bf16.msra.mxu0 0
    %369 = vmatpush.bf16.msra.mxu0 0
    %370 = vmatpush.bf16.msra.mxu0 0
    %371 = vmatpush.bf16.msra.mxu0 %v228
    %372 = vmatpush.bf16.msra.mxu0 %v227
    %373 = vmatmul.bf16.gmra.mxu0 %v363
    %v374 = vpop.f32.mrf.mxu0
    %v375 = vadd.f32 %v356, %v374
    %v376 = vpop.f32.mrf.mxu0
    %377 = vdwg.mxu0
    %v378 = vadd.f32 %v375, %v247
    %v379 = vxor.u32 %v378, 2147483648
    %v380 = vmul.f32 %v379, 1.442695
    %v381 = vpow.pop %v380
    %v382 = vadd.f32 %v381, 1.0
    %v383 = vrcp.pop %v382
    %v384 = vmul.f32 %v382, %v383
    %v385 = vsub.f32 1.0, %v384
    %v386 = vmul.f32 %v383, %v385
    %v387 = vadd.f32 %v383, %v386
    %vm388 = vweird.f32 %v382
    %vm389 = vweird.f32 %v383
    %vm390 = vmor %vm388, %vm389
    %v391 = vsel %vm390, %v383, %v387
    %v392 = vand.u32 2147483647, %v382
    %vm393 = vcmp.eq.f32.partialorder %v392, 8.507059e+37
    %v394 = vand.u32 %v382, 2147483648
    %v395 = vor.u32 1.1754944e-38, %v394
    %v396 = vsel %vm393, %v395, %v391
    %v397 = vmul.f32 1.0, %v396
    %v398 = vtanh.pop %v378
    %v399 = vmul.f32 %v397, %v279
    %401 = vrot.lane.b32.xlu0 %v398, 64
    %v402 = vpop.permute.xlu0 %401
    %v404 = vmul.f32 %v397, %v402
    %406 = vrot.lane.b32.xlu0 %v404, 32
    %v407 = vpop.permute.xlu0 %406
    %v409 = vadd.f32 %v399, %v407
    %v410 = vtanh.pop %v409
    %412 = vrot.lane.b32.xlu0 %v410, 64
    %v413 = vpop.permute.xlu0 %412
    %v415 = vmul.f32 %v397, %v413
    %v416 = vpack.c.bf16 %v415, %v415
    %v417 = vadd.f32 %v287, %v415
    %418 = vmatpush.bf16.msra.mxu0 0
    %419 = vmatpush.bf16.msra.mxu0 0
    %420 = vmatpush.bf16.msra.mxu0 0
    %421 = vmatpush.bf16.msra.mxu0 0
    %422 = vmatpush.bf16.msra.mxu0 0
    %423 = vmatpush.bf16.msra.mxu0 0
    %424 = vmatpush.bf16.msra.mxu0 %v132
    %425 = vmatpush.bf16.msra.mxu0 %v131
    %426 = vmatmul.bf16.gmra.mxu0 %v363
    %v427 = vpop.f32.mrf.mxu0
    %v428 = vadd.f32 0.0, %v427
    %v429 = vpop.f32.mrf.mxu0
    %430 = vdwg.mxu0
    %v431 = vadd.f32 %v109, %v428
    %v432 = vxor.u32 %v431, 2147483648
    %v433 = vmul.f32 %v432, 1.442695
    %v434 = vpow.pop %v433
    %v435 = vadd.f32 %v434, 1.0
    %v436 = vrcp.pop %v435
    %v437 = vmul.f32 %v435, %v436
    %v438 = vsub.f32 1.0, %v437
    %v439 = vmul.f32 %v436, %v438
    %v440 = vadd.f32 %v436, %v439
    %vm441 = vweird.f32 %v435
    %vm442 = vweird.f32 %v436
    %vm443 = vmor %vm441, %vm442
    %v444 = vsel %vm443, %v436, %v440
    %v445 = vand.u32 2147483647, %v435
    %vm446 = vcmp.eq.f32.partialorder %v445, 8.507059e+37
    %v447 = vand.u32 %v435, 2147483648
    %v448 = vor.u32 1.1754944e-38, %v447
    %v449 = vsel %vm446, %v448, %v444
    %v450 = vmul.f32 1.0, %v449
    %v451 = vtanh.pop %v431
    %v452 = vmul.f32 %v450, %v332
    %454 = vrot.lane.b32.xlu0 %v451, 64
    %v455 = vpop.permute.xlu0 %454
    %v457 = vmul.f32 %v450, %v455
    %459 = vrot.lane.b32.xlu0 %v457, 32
    %v460 = vpop.permute.xlu0 %459
    %v462 = vadd.f32 %v452, %v460
    %v463 = vtanh.pop %v462
    %465 = vrot.lane.b32.xlu0 %v463, 64
    %v466 = vpop.permute.xlu0 %465
    %v468 = vmul.f32 %v450, %v466
    %v469 = vpack.c.bf16 %v468, %v468
    %471 = vrot.lane.b32.xlu0 %v416, 32
    %v472 = vpop.permute.xlu0 %471
    %v474 = vsel %vm135, %v472, 0
    %476 = vmatpush.bf16.msra.mxu0 0
    %477 = vmatpush.bf16.msra.mxu0 0
    %478 = vmatpush.bf16.msra.mxu0 0
    %479 = vmatpush.bf16.msra.mxu0 0
    %480 = vmatpush.bf16.msra.mxu0 0
    %481 = vmatpush.bf16.msra.mxu0 0
    %482 = vmatpush.bf16.msra.mxu0 %v200
    %483 = vmatpush.bf16.msra.mxu0 %v199
    %484 = vmatmul.bf16.gmra.mxu0 %v474
    %v485 = vpop.f32.mrf.mxu0
    %v486 = vadd.f32 0.0, %v485
    %v487 = vpop.f32.mrf.mxu0
    %488 = vdwg.mxu0
    %490 = vrot.lane.b32.xlu0 %v469, 32
    %v491 = vpop.permute.xlu0 %490
    %v493 = vsel %vm135, %v491, 0
    %495 = vmatpush.bf16.msra.mxu0 0
    %496 = vmatpush.bf16.msra.mxu0 0
    %497 = vmatpush.bf16.msra.mxu0 0
    %498 = vmatpush.bf16.msra.mxu0 0
    %499 = vmatpush.bf16.msra.mxu0 0
    %500 = vmatpush.bf16.msra.mxu0 0
    %501 = vmatpush.bf16.msra.mxu0 %v228
    %502 = vmatpush.bf16.msra.mxu0 %v227
    %503 = vmatmul.bf16.gmra.mxu0 %v493
    %v504 = vpop.f32.mrf.mxu0
    %v505 = vadd.f32 %v486, %v504
    %v506 = vpop.f32.mrf.mxu0
    %507 = vdwg.mxu0
    %v508 = vadd.f32 %v505, %v247
    %v509 = vxor.u32 %v508, 2147483648
    %v510 = vmul.f32 %v509, 1.442695
    %v511 = vpow.pop %v510
    %v512 = vadd.f32 %v511, 1.0
    %v513 = vrcp.pop %v512
    %v514 = vmul.f32 %v512, %v513
    %v515 = vsub.f32 1.0, %v514
    %v516 = vmul.f32 %v513, %v515
    %v517 = vadd.f32 %v513, %v516
    %vm518 = vweird.f32 %v512
    %vm519 = vweird.f32 %v513
    %vm520 = vmor %vm518, %vm519
    %v521 = vsel %vm520, %v513, %v517
    %v522 = vand.u32 2147483647, %v512
    %vm523 = vcmp.eq.f32.partialorder %v522, 8.507059e+37
    %v524 = vand.u32 %v512, 2147483648
    %v525 = vor.u32 1.1754944e-38, %v524
    %v526 = vsel %vm523, %v525, %v521
    %v527 = vmul.f32 1.0, %v526
    %v528 = vtanh.pop %v508
    %v529 = vmul.f32 %v527, %v409
    %531 = vrot.lane.b32.xlu0 %v528, 64
    %v532 = vpop.permute.xlu0 %531
    %v534 = vmul.f32 %v527, %v532
    %536 = vrot.lane.b32.xlu0 %v534, 32
    %v537 = vpop.permute.xlu0 %536
    %v539 = vadd.f32 %v529, %v537
    %v540 = vtanh.pop %v539
    %542 = vrot.lane.b32.xlu0 %v540, 64
    %v543 = vpop.permute.xlu0 %542
    %v545 = vmul.f32 %v527, %v543
    %v546 = vpack.c.bf16 %v545, %v545
    %v547 = vadd.f32 %v417, %v545
    %548 = vmatpush.bf16.msra.mxu0 0
    %549 = vmatpush.bf16.msra.mxu0 0
    %550 = vmatpush.bf16.msra.mxu0 0
    %551 = vmatpush.bf16.msra.mxu0 0
    %552 = vmatpush.bf16.msra.mxu0 0
    %553 = vmatpush.bf16.msra.mxu0 0
    %554 = vmatpush.bf16.msra.mxu0 %v132
    %555 = vmatpush.bf16.msra.mxu0 %v131
    %556 = vmatmul.bf16.gmra.mxu0 %v493
    %v557 = vpop.f32.mrf.mxu0
    %v558 = vadd.f32 0.0, %v557
    %v559 = vpop.f32.mrf.mxu0
    %560 = vdwg.mxu0
    %v561 = vadd.f32 %v111, %v558
    %v562 = vxor.u32 %v561, 2147483648
    %v563 = vmul.f32 %v562, 1.442695
    %v564 = vpow.pop %v563
    %v565 = vadd.f32 %v564, 1.0
    %v566 = vrcp.pop %v565
    %v567 = vmul.f32 %v565, %v566
    %v568 = vsub.f32 1.0, %v567
    %v569 = vmul.f32 %v566, %v568
    %v570 = vadd.f32 %v566, %v569
    %vm571 = vweird.f32 %v565
    %vm572 = vweird.f32 %v566
    %vm573 = vmor %vm571, %vm572
    %v574 = vsel %vm573, %v566, %v570
    %v575 = vand.u32 2147483647, %v565
    %vm576 = vcmp.eq.f32.partialorder %v575, 8.507059e+37
    %v577 = vand.u32 %v565, 2147483648
    %v578 = vor.u32 1.1754944e-38, %v577
    %v579 = vsel %vm576, %v578, %v574
    %v580 = vmul.f32 1.0, %v579
    %v581 = vtanh.pop %v561
    %v582 = vmul.f32 %v580, %v462
    %584 = vrot.lane.b32.xlu0 %v581, 64
    %v585 = vpop.permute.xlu0 %584
    %v587 = vmul.f32 %v580, %v585
    %589 = vrot.lane.b32.xlu0 %v587, 32
    %v590 = vpop.permute.xlu0 %589
    %v592 = vadd.f32 %v582, %v590
    %v593 = vtanh.pop %v592
    %595 = vrot.lane.b32.xlu0 %v593, 64
    %v596 = vpop.permute.xlu0 %595
    %v598 = vmul.f32 %v580, %v596
    %v599 = vpack.c.bf16 %v598, %v598
    %601 = vrot.lane.b32.xlu0 %v546, 32
    %v602 = vpop.permute.xlu0 %601
    %v604 = vsel %vm135, %v602, 0
    %606 = vmatpush.bf16.msra.mxu0 0
    %607 = vmatpush.bf16.msra.mxu0 0
    %608 = vmatpush.bf16.msra.mxu0 0
    %609 = vmatpush.bf16.msra.mxu0 0
    %610 = vmatpush.bf16.msra.mxu0 0
    %611 = vmatpush.bf16.msra.mxu0 0
    %612 = vmatpush.bf16.msra.mxu0 %v200
    %613 = vmatpush.bf16.msra.mxu0 %v199
    %614 = vmatmul.bf16.gmra.mxu0 %v604
    %v615 = vpop.f32.mrf.mxu0
    %v616 = vadd.f32 0.0, %v615
    %v617 = vpop.f32.mrf.mxu0
    %618 = vdwg.mxu0
    %620 = vrot.lane.b32.xlu0 %v599, 32
    %v621 = vpop.permute.xlu0 %620
    %v623 = vsel %vm135, %v621, 0
    %625 = vmatpush.bf16.msra.mxu0 0
    %626 = vmatpush.bf16.msra.mxu0 0
    %627 = vmatpush.bf16.msra.mxu0 0
    %628 = vmatpush.bf16.msra.mxu0 0
    %629 = vmatpush.bf16.msra.mxu0 0
    %630 = vmatpush.bf16.msra.mxu0 0
    %631 = vmatpush.bf16.msra.mxu0 %v228
    %632 = vmatpush.bf16.msra.mxu0 %v227
    %633 = vmatmul.bf16.gmra.mxu0 %v623
    %v634 = vpop.f32.mrf.mxu0
    %v635 = vadd.f32 %v616, %v634
    %v636 = vpop.f32.mrf.mxu0
    %637 = vdwg.mxu0
    %v638 = vadd.f32 %v635, %v247
    %v639 = vxor.u32 %v638, 2147483648
    %v640 = vmul.f32 %v639, 1.442695
    %v641 = vpow.pop %v640
    %v642 = vadd.f32 %v641, 1.0
    %v643 = vrcp.pop %v642
    %v644 = vmul.f32 %v642, %v643
    %v645 = vsub.f32 1.0, %v644
    %v646 = vmul.f32 %v643, %v645
    %v647 = vadd.f32 %v643, %v646
    %vm648 = vweird.f32 %v642
    %vm649 = vweird.f32 %v643
    %vm650 = vmor %vm648, %vm649
    %v651 = vsel %vm650, %v643, %v647
    %v652 = vand.u32 2147483647, %v642
    %vm653 = vcmp.eq.f32.partialorder %v652, 8.507059e+37
    %v654 = vand.u32 %v642, 2147483648
    %v655 = vor.u32 1.1754944e-38, %v654
    %v656 = vsel %vm653, %v655, %v651
    %v657 = vmul.f32 1.0, %v656
    %v658 = vtanh.pop %v638
    %v659 = vmul.f32 %v657, %v539
    %661 = vrot.lane.b32.xlu0 %v658, 64
    %v662 = vpop.permute.xlu0 %661
    %v664 = vmul.f32 %v657, %v662
    %666 = vrot.lane.b32.xlu0 %v664, 32
    %v667 = vpop.permute.xlu0 %666
    %v669 = vadd.f32 %v659, %v667
    %v670 = vtanh.pop %v669
    %672 = vrot.lane.b32.xlu0 %v670, 64
    %v673 = vpop.permute.xlu0 %672
    %v675 = vmul.f32 %v657, %v673
    %v676 = vpack.c.bf16 %v675, %v675
    %v677 = vadd.f32 %v547, %v675
    %678 = vmatpush.bf16.msra.mxu0 0
    %679 = vmatpush.bf16.msra.mxu0 0
    %680 = vmatpush.bf16.msra.mxu0 0
    %681 = vmatpush.bf16.msra.mxu0 0
    %682 = vmatpush.bf16.msra.mxu0 0
    %683 = vmatpush.bf16.msra.mxu0 0
    %684 = vmatpush.bf16.msra.mxu0 %v132
    %685 = vmatpush.bf16.msra.mxu0 %v131
    %686 = vmatmul.bf16.gmra.mxu0 %v623
    %v687 = vpop.f32.mrf.mxu0
    %v688 = vadd.f32 0.0, %v687
    %v689 = vpop.f32.mrf.mxu0
    %690 = vdwg.mxu0
    %v691 = vadd.f32 %v114, %v688
    %v692 = vxor.u32 %v691, 2147483648
    %v693 = vmul.f32 %v692, 1.442695
    %v694 = vpow.pop %v693
    %v695 = vadd.f32 %v694, 1.0
    %v696 = vrcp.pop %v695
    %v697 = vmul.f32 %v695, %v696
    %v698 = vsub.f32 1.0, %v697
    %v699 = vmul.f32 %v696, %v698
    %v700 = vadd.f32 %v696, %v699
    %vm701 = vweird.f32 %v695
    %vm702 = vweird.f32 %v696
    %vm703 = vmor %vm701, %vm702
    %v704 = vsel %vm703, %v696, %v700
    %v705 = vand.u32 2147483647, %v695
    %vm706 = vcmp.eq.f32.partialorder %v705, 8.507059e+37
    %v707 = vand.u32 %v695, 2147483648
    %v708 = vor.u32 1.1754944e-38, %v707
    %v709 = vsel %vm706, %v708, %v704
    %v710 = vmul.f32 1.0, %v709
    %v711 = vtanh.pop %v691
    %v712 = vmul.f32 %v710, %v592
    %714 = vrot.lane.b32.xlu0 %v711, 64
    %v715 = vpop.permute.xlu0 %714
    %v717 = vmul.f32 %v710, %v715
    %719 = vrot.lane.b32.xlu0 %v717, 32
    %v720 = vpop.permute.xlu0 %719
    %v722 = vadd.f32 %v712, %v720
    %v723 = vtanh.pop %v722
    %725 = vrot.lane.b32.xlu0 %v723, 64
    %v726 = vpop.permute.xlu0 %725
    %v728 = vmul.f32 %v710, %v726
    %v729 = vpack.c.bf16 %v728, %v728
    %731 = vrot.lane.b32.xlu0 %v676, 32
    %v732 = vpop.permute.xlu0 %731
    %v734 = vsel %vm135, %v732, 0
    %736 = vmatpush.bf16.msra.mxu0 0
    %737 = vmatpush.bf16.msra.mxu0 0
    %738 = vmatpush.bf16.msra.mxu0 0
    %739 = vmatpush.bf16.msra.mxu0 0
    %740 = vmatpush.bf16.msra.mxu0 0
    %741 = vmatpush.bf16.msra.mxu0 0
    %742 = vmatpush.bf16.msra.mxu0 %v200
    %743 = vmatpush.bf16.msra.mxu0 %v199
    %744 = vmatmul.bf16.gmra.mxu0 %v734
    %v745 = vpop.f32.mrf.mxu0
    %v746 = vadd.f32 0.0, %v745
    %v747 = vpop.f32.mrf.mxu0
    %748 = vdwg.mxu0
    %750 = vrot.lane.b32.xlu0 %v729, 32
    %v751 = vpop.permute.xlu0 %750
    %v753 = vsel %vm135, %v751, 0
    %755 = vmatpush.bf16.msra.mxu0 0
    %756 = vmatpush.bf16.msra.mxu0 0
    %757 = vmatpush.bf16.msra.mxu0 0
    %758 = vmatpush.bf16.msra.mxu0 0
    %759 = vmatpush.bf16.msra.mxu0 0
    %760 = vmatpush.bf16.msra.mxu0 0
    %761 = vmatpush.bf16.msra.mxu0 %v228
    %762 = vmatpush.bf16.msra.mxu0 %v227
    %763 = vmatmul.bf16.gmra.mxu0 %v753
    %v764 = vpop.f32.mrf.mxu0
    %v765 = vadd.f32 %v746, %v764
    %v766 = vpop.f32.mrf.mxu0
    %767 = vdwg.mxu0
    %v768 = vadd.f32 %v765, %v247
    %v769 = vxor.u32 %v768, 2147483648
    %v770 = vmul.f32 %v769, 1.442695
    %v771 = vpow.pop %v770
    %v772 = vadd.f32 %v771, 1.0
    %v773 = vrcp.pop %v772
    %v774 = vmul.f32 %v772, %v773
    %v775 = vsub.f32 1.0, %v774
    %v776 = vmul.f32 %v773, %v775
    %v777 = vadd.f32 %v773, %v776
    %vm778 = vweird.f32 %v772
    %vm779 = vweird.f32 %v773
    %vm780 = vmor %vm778, %vm779
    %v781 = vsel %vm780, %v773, %v777
    %v782 = vand.u32 2147483647, %v772
    %vm783 = vcmp.eq.f32.partialorder %v782, 8.507059e+37
    %v784 = vand.u32 %v772, 2147483648
    %v785 = vor.u32 1.1754944e-38, %v784
    %v786 = vsel %vm783, %v785, %v781
    %v787 = vmul.f32 1.0, %v786
    %v788 = vtanh.pop %v768
    %v789 = vmul.f32 %v787, %v669
    %791 = vrot.lane.b32.xlu0 %v788, 64
    %v792 = vpop.permute.xlu0 %791
    %v794 = vmul.f32 %v787, %v792
    %796 = vrot.lane.b32.xlu0 %v794, 32
    %v797 = vpop.permute.xlu0 %796
    %v799 = vadd.f32 %v789, %v797
    %v800 = vtanh.pop %v799
    %802 = vrot.lane.b32.xlu0 %v800, 64
    %v803 = vpop.permute.xlu0 %802
    %v805 = vmul.f32 %v787, %v803
    %v806 = vpack.c.bf16 %v805, %v805
    %v807 = vadd.f32 %v677, %v805
    %808 = vmatpush.bf16.msra.mxu0 0
    %809 = vmatpush.bf16.msra.mxu0 0
    %810 = vmatpush.bf16.msra.mxu0 0
    %811 = vmatpush.bf16.msra.mxu0 0
    %812 = vmatpush.bf16.msra.mxu0 0
    %813 = vmatpush.bf16.msra.mxu0 0
    %814 = vmatpush.bf16.msra.mxu0 %v132
    %815 = vmatpush.bf16.msra.mxu0 %v131
    %816 = vmatmul.bf16.gmra.mxu0 %v753
    %v817 = vpop.f32.mrf.mxu0
    %v818 = vadd.f32 0.0, %v817
    %v819 = vpop.f32.mrf.mxu0
    %820 = vdwg.mxu0
    %v821 = vadd.f32 %v116, %v818
    %v822 = vxor.u32 %v821, 2147483648
    %v823 = vmul.f32 %v822, 1.442695
    %v824 = vpow.pop %v823
    %v825 = vadd.f32 %v824, 1.0
    %v826 = vrcp.pop %v825
    %v827 = vmul.f32 %v825, %v826
    %v828 = vsub.f32 1.0, %v827
    %v829 = vmul.f32 %v826, %v828
    %v830 = vadd.f32 %v826, %v829
    %vm831 = vweird.f32 %v825
    %vm832 = vweird.f32 %v826
    %vm833 = vmor %vm831, %vm832
    %v834 = vsel %vm833, %v826, %v830
    %v835 = vand.u32 2147483647, %v825
    %vm836 = vcmp.eq.f32.partialorder %v835, 8.507059e+37
    %v837 = vand.u32 %v825, 2147483648
    %v838 = vor.u32 1.1754944e-38, %v837
    %v839 = vsel %vm836, %v838, %v834
    %v840 = vmul.f32 1.0, %v839
    %v841 = vtanh.pop %v821
    %v842 = vmul.f32 %v840, %v722
    %844 = vrot.lane.b32.xlu0 %v841, 64
    %v845 = vpop.permute.xlu0 %844
    %v847 = vmul.f32 %v840, %v845
    %849 = vrot.lane.b32.xlu0 %v847, 32
    %v850 = vpop.permute.xlu0 %849
    %v852 = vadd.f32 %v842, %v850
    %v853 = vtanh.pop %v852
    %855 = vrot.lane.b32.xlu0 %v853, 64
    %v856 = vpop.permute.xlu0 %855
    %v858 = vmul.f32 %v840, %v856
    %v859 = vpack.c.bf16 %v858, %v858
    %861 = vrot.lane.b32.xlu0 %v806, 32
    %v862 = vpop.permute.xlu0 %861
    %v864 = vsel %vm135, %v862, 0
    %866 = vmatpush.bf16.msra.mxu0 0
    %867 = vmatpush.bf16.msra.mxu0 0
    %868 = vmatpush.bf16.msra.mxu0 0
    %869 = vmatpush.bf16.msra.mxu0 0
    %870 = vmatpush.bf16.msra.mxu0 0
    %871 = vmatpush.bf16.msra.mxu0 0
    %872 = vmatpush.bf16.msra.mxu0 %v200
    %873 = vmatpush.bf16.msra.mxu0 %v199
    %874 = vmatmul.bf16.gmra.mxu0 %v864
    %v875 = vpop.f32.mrf.mxu0
    %v876 = vadd.f32 0.0, %v875
    %v877 = vpop.f32.mrf.mxu0
    %878 = vdwg.mxu0
    %880 = vrot.lane.b32.xlu0 %v859, 32
    %v881 = vpop.permute.xlu0 %880
    %v883 = vsel %vm135, %v881, 0
    %885 = vmatpush.bf16.msra.mxu0 0
    %886 = vmatpush.bf16.msra.mxu0 0
    %887 = vmatpush.bf16.msra.mxu0 0
    %888 = vmatpush.bf16.msra.mxu0 0
    %889 = vmatpush.bf16.msra.mxu0 0
    %890 = vmatpush.bf16.msra.mxu0 0
    %891 = vmatpush.bf16.msra.mxu0 %v228
    %892 = vmatpush.bf16.msra.mxu0 %v227
    %893 = vmatmul.bf16.gmra.mxu0 %v883
    %v894 = vpop.f32.mrf.mxu0
    %v895 = vadd.f32 %v876, %v894
    %v896 = vpop.f32.mrf.mxu0
    %897 = vdwg.mxu0
    %v898 = vadd.f32 %v895, %v247
    %v899 = vxor.u32 %v898, 2147483648
    %v900 = vmul.f32 %v899, 1.442695
    %v901 = vpow.pop %v900
    %v902 = vadd.f32 %v901, 1.0
    %v903 = vrcp.pop %v902
    %v904 = vmul.f32 %v902, %v903
    %v905 = vsub.f32 1.0, %v904
    %v906 = vmul.f32 %v903, %v905
    %v907 = vadd.f32 %v903, %v906
    %vm908 = vweird.f32 %v902
    %vm909 = vweird.f32 %v903
    %vm910 = vmor %vm908, %vm909
    %v911 = vsel %vm910, %v903, %v907
    %v912 = vand.u32 2147483647, %v902
    %vm913 = vcmp.eq.f32.partialorder %v912, 8.507059e+37
    %v914 = vand.u32 %v902, 2147483648
    %v915 = vor.u32 1.1754944e-38, %v914
    %v916 = vsel %vm913, %v915, %v911
    %v917 = vmul.f32 1.0, %v916
    %v918 = vtanh.pop %v898
    %v919 = vmul.f32 %v917, %v799
    %921 = vrot.lane.b32.xlu0 %v918, 64
    %v922 = vpop.permute.xlu0 %921
    %v924 = vmul.f32 %v917, %v922
    %926 = vrot.lane.b32.xlu0 %v924, 32
    %v927 = vpop.permute.xlu0 %926
    %v929 = vadd.f32 %v919, %v927
    %v930 = vtanh.pop %v929
    %932 = vrot.lane.b32.xlu0 %v930, 64
    %v933 = vpop.permute.xlu0 %932
    %v935 = vmul.f32 %v917, %v933
    %v936 = vpack.c.bf16 %v935, %v935
    %v937 = vadd.f32 %v807, %v935
    %938 = vmatpush.bf16.msra.mxu0 0
    %939 = vmatpush.bf16.msra.mxu0 0
    %940 = vmatpush.bf16.msra.mxu0 0
    %941 = vmatpush.bf16.msra.mxu0 0
    %942 = vmatpush.bf16.msra.mxu0 0
    %943 = vmatpush.bf16.msra.mxu0 0
    %944 = vmatpush.bf16.msra.mxu0 %v132
    %945 = vmatpush.bf16.msra.mxu0 %v131
    %946 = vmatmul.bf16.gmra.mxu0 %v883
    %v947 = vpop.f32.mrf.mxu0
    %v948 = vadd.f32 0.0, %v947
    %v949 = vpop.f32.mrf.mxu0
    %950 = vdwg.mxu0
    %v951 = vadd.f32 %v119, %v948
    %v952 = vxor.u32 %v951, 2147483648
    %v953 = vmul.f32 %v952, 1.442695
    %v954 = vpow.pop %v953
    %v955 = vadd.f32 %v954, 1.0
    %v956 = vrcp.pop %v955
    %v957 = vmul.f32 %v955, %v956
    %v958 = vsub.f32 1.0, %v957
    %v959 = vmul.f32 %v956, %v958
    %v960 = vadd.f32 %v956, %v959
    %vm961 = vweird.f32 %v955
    %vm962 = vweird.f32 %v956
    %vm963 = vmor %vm961, %vm962
    %v964 = vsel %vm963, %v956, %v960
    %v965 = vand.u32 2147483647, %v955
    %vm966 = vcmp.eq.f32.partialorder %v965, 8.507059e+37
    %v967 = vand.u32 %v955, 2147483648
    %v968 = vor.u32 1.1754944e-38, %v967
    %v969 = vsel %vm966, %v968, %v964
    %v970 = vmul.f32 1.0, %v969
    %v971 = vtanh.pop %v951
    %v972 = vmul.f32 %v970, %v852
    %974 = vrot.lane.b32.xlu0 %v971, 64
    %v975 = vpop.permute.xlu0 %974
    %v977 = vmul.f32 %v970, %v975
    %979 = vrot.lane.b32.xlu0 %v977, 32
    %v980 = vpop.permute.xlu0 %979
    %v982 = vadd.f32 %v972, %v980
    %v983 = vtanh.pop %v982
    %985 = vrot.lane.b32.xlu0 %v983, 64
    %v986 = vpop.permute.xlu0 %985
    %v988 = vmul.f32 %v970, %v986
    %v989 = vpack.c.bf16 %v988, %v988
    %991 = vrot.lane.b32.xlu0 %v936, 32
    %v992 = vpop.permute.xlu0 %991
    %v994 = vsel %vm135, %v992, 0
    %996 = vmatpush.bf16.msra.mxu0 0
    %997 = vmatpush.bf16.msra.mxu0 0
    %998 = vmatpush.bf16.msra.mxu0 0
    %999 = vmatpush.bf16.msra.mxu0 0
    %1000 = vmatpush.bf16.msra.mxu0 0
    %1001 = vmatpush.bf16.msra.mxu0 0
    %1002 = vmatpush.bf16.msra.mxu0 %v200
    %1003 = vmatpush.bf16.msra.mxu0 %v199
    %1004 = vmatmul.bf16.gmra.mxu0 %v994
    %v1005 = vpop.f32.mrf.mxu0
    %v1006 = vadd.f32 0.0, %v1005
    %v1007 = vpop.f32.mrf.mxu0
    %1008 = vdwg.mxu0
    %1010 = vrot.lane.b32.xlu0 %v989, 32
    %v1011 = vpop.permute.xlu0 %1010
    %v1013 = vsel %vm135, %v1011, 0
    %1015 = vmatpush.bf16.msra.mxu0 0
    %1016 = vmatpush.bf16.msra.mxu0 0
    %1017 = vmatpush.bf16.msra.mxu0 0
    %1018 = vmatpush.bf16.msra.mxu0 0
    %1019 = vmatpush.bf16.msra.mxu0 0
    %1020 = vmatpush.bf16.msra.mxu0 0
    %1021 = vmatpush.bf16.msra.mxu0 %v228
    %1022 = vmatpush.bf16.msra.mxu0 %v227
    %1023 = vmatmul.bf16.gmra.mxu0 %v1013
    %v1024 = vpop.f32.mrf.mxu0
    %v1025 = vadd.f32 %v1006, %v1024
    %v1026 = vpop.f32.mrf.mxu0
    %1027 = vdwg.mxu0
    %v1028 = vadd.f32 %v1025, %v247
    %v1029 = vxor.u32 %v1028, 2147483648
    %v1030 = vmul.f32 %v1029, 1.442695
    %v1031 = vpow.pop %v1030
    %v1032 = vadd.f32 %v1031, 1.0
    %v1033 = vrcp.pop %v1032
    %v1034 = vmul.f32 %v1032, %v1033
    %v1035 = vsub.f32 1.0, %v1034
    %v1036 = vmul.f32 %v1033, %v1035
    %v1037 = vadd.f32 %v1033, %v1036
    %vm1038 = vweird.f32 %v1032
    %vm1039 = vweird.f32 %v1033
    %vm1040 = vmor %vm1038, %vm1039
    %v1041 = vsel %vm1040, %v1033, %v1037
    %v1042 = vand.u32 2147483647, %v1032
    %vm1043 = vcmp.eq.f32.partialorder %v1042, 8.507059e+37
    %v1044 = vand.u32 %v1032, 2147483648
    %v1045 = vor.u32 1.1754944e-38, %v1044
    %v1046 = vsel %vm1043, %v1045, %v1041
    %v1047 = vmul.f32 1.0, %v1046
    %v1048 = vtanh.pop %v1028
    %v1049 = vmul.f32 %v1047, %v929
    %1051 = vrot.lane.b32.xlu0 %v1048, 64
    %v1052 = vpop.permute.xlu0 %1051
    %v1054 = vmul.f32 %v1047, %v1052
    %1056 = vrot.lane.b32.xlu0 %v1054, 32
    %v1057 = vpop.permute.xlu0 %1056
    %v1059 = vadd.f32 %v1049, %v1057
    %v1060 = vtanh.pop %v1059
    %1062 = vrot.lane.b32.xlu0 %v1060, 64
    %v1063 = vpop.permute.xlu0 %1062
    %v1065 = vmul.f32 %v1047, %v1063
    %v1066 = vpack.c.bf16 %v1065, %v1065
    %v1067 = vadd.f32 %v937, %v1065
    %1068 = vmatpush.bf16.msra.mxu0 0
    %1069 = vmatpush.bf16.msra.mxu0 0
    %1070 = vmatpush.bf16.msra.mxu0 0
    %1071 = vmatpush.bf16.msra.mxu0 0
    %1072 = vmatpush.bf16.msra.mxu0 0
    %1073 = vmatpush.bf16.msra.mxu0 0
    %1074 = vmatpush.bf16.msra.mxu0 %v132
    %1075 = vmatpush.bf16.msra.mxu0 %v131
    %1076 = vmatmul.bf16.gmra.mxu0 %v1013
    %v1077 = vpop.f32.mrf.mxu0
    %v1078 = vadd.f32 0.0, %v1077
    %v1079 = vpop.f32.mrf.mxu0
    %1080 = vdwg.mxu0
    %v1081 = vadd.f32 %v121, %v1078
    %v1082 = vxor.u32 %v1081, 2147483648
    %v1083 = vmul.f32 %v1082, 1.442695
    %v1084 = vpow.pop %v1083
    %v1085 = vadd.f32 %v1084, 1.0
    %v1086 = vrcp.pop %v1085
    %v1087 = vmul.f32 %v1085, %v1086
    %v1088 = vsub.f32 1.0, %v1087
    %v1089 = vmul.f32 %v1086, %v1088
    %v1090 = vadd.f32 %v1086, %v1089
    %vm1091 = vweird.f32 %v1085
    %vm1092 = vweird.f32 %v1086
    %vm1093 = vmor %vm1091, %vm1092
    %v1094 = vsel %vm1093, %v1086, %v1090
    %v1095 = vand.u32 2147483647, %v1085
    %vm1096 = vcmp.eq.f32.partialorder %v1095, 8.507059e+37
    %v1097 = vand.u32 %v1085, 2147483648
    %v1098 = vor.u32 1.1754944e-38, %v1097
    %v1099 = vsel %vm1096, %v1098, %v1094
    %v1100 = vmul.f32 1.0, %v1099
    %v1101 = vtanh.pop %v1081
    %v1102 = vmul.f32 %v1100, %v982
    %1104 = vrot.lane.b32.xlu0 %v1101, 64
    %v1105 = vpop.permute.xlu0 %1104
    %v1107 = vmul.f32 %v1100, %v1105
    %1109 = vrot.lane.b32.xlu0 %v1107, 32
    %v1110 = vpop.permute.xlu0 %1109
    %v1112 = vadd.f32 %v1102, %v1110
    %v1113 = vtanh.pop %v1112
    %1115 = vrot.lane.b32.xlu0 %v1113, 64
    %v1116 = vpop.permute.xlu0 %1115
    %v1118 = vmul.f32 %v1100, %v1116
    %v1119 = vpack.c.bf16 %v1118, %v1118
    %1121 = vrot.lane.b32.xlu0 %v1066, 32
    %v1122 = vpop.permute.xlu0 %1121
    %v1124 = vsel %vm135, %v1122, 0
    %1126 = vmatpush.bf16.msra.mxu0 0
    %1127 = vmatpush.bf16.msra.mxu0 0
    %1128 = vmatpush.bf16.msra.mxu0 0
    %1129 = vmatpush.bf16.msra.mxu0 0
    %1130 = vmatpush.bf16.msra.mxu0 0
    %1131 = vmatpush.bf16.msra.mxu0 0
    %1132 = vmatpush.bf16.msra.mxu0 %v200
    %1133 = vmatpush.bf16.msra.mxu0 %v199
    %1134 = vmatmul.bf16.gmra.mxu0 %v1124
    %v1135 = vpop.f32.mrf.mxu0
    %v1136 = vadd.f32 0.0, %v1135
    %v1137 = vpop.f32.mrf.mxu0
    %1138 = vdwg.mxu0
    %1140 = vrot.lane.b32.xlu0 %v1119, 32
    %v1141 = vpop.permute.xlu0 %1140
    %v1143 = vsel %vm135, %v1141, 0
    %1145 = vmatpush.bf16.msra.mxu0 0
    %1146 = vmatpush.bf16.msra.mxu0 0
    %1147 = vmatpush.bf16.msra.mxu0 0
    %1148 = vmatpush.bf16.msra.mxu0 0
    %1149 = vmatpush.bf16.msra.mxu0 0
    %1150 = vmatpush.bf16.msra.mxu0 0
    %1151 = vmatpush.bf16.msra.mxu0 %v228
    %1152 = vmatpush.bf16.msra.mxu0 %v227
    %1153 = vmatmul.bf16.gmra.mxu0 %v1143
    %v1154 = vpop.f32.mrf.mxu0
    %v1155 = vadd.f32 %v1136, %v1154
    %v1156 = vpop.f32.mrf.mxu0
    %1157 = vdwg.mxu0
    %v1158 = vadd.f32 %v1155, %v247
    %v1159 = vxor.u32 %v1158, 2147483648
    %v1160 = vmul.f32 %v1159, 1.442695
    %v1161 = vpow.pop %v1160
    %v1162 = vadd.f32 %v1161, 1.0
    %v1163 = vrcp.pop %v1162
    %v1164 = vmul.f32 %v1162, %v1163
    %v1165 = vsub.f32 1.0, %v1164
    %v1166 = vmul.f32 %v1163, %v1165
    %v1167 = vadd.f32 %v1163, %v1166
    %vm1168 = vweird.f32 %v1162
    %vm1169 = vweird.f32 %v1163
    %vm1170 = vmor %vm1168, %vm1169
    %v1171 = vsel %vm1170, %v1163, %v1167
    %v1172 = vand.u32 2147483647, %v1162
    %vm1173 = vcmp.eq.f32.partialorder %v1172, 8.507059e+37
    %v1174 = vand.u32 %v1162, 2147483648
    %v1175 = vor.u32 1.1754944e-38, %v1174
    %v1176 = vsel %vm1173, %v1175, %v1171
    %v1177 = vmul.f32 1.0, %v1176
    %v1178 = vtanh.pop %v1158
    %v1179 = vmul.f32 %v1177, %v1059
    %1181 = vrot.lane.b32.xlu0 %v1178, 64
    %v1182 = vpop.permute.xlu0 %1181
    %v1184 = vmul.f32 %v1177, %v1182
    %1186 = vrot.lane.b32.xlu0 %v1184, 32
    %v1187 = vpop.permute.xlu0 %1186
    %v1189 = vadd.f32 %v1179, %v1187
    %v1190 = vtanh.pop %v1189
    %1192 = vrot.lane.b32.xlu0 %v1190, 64
    %v1193 = vpop.permute.xlu0 %1192
    %v1195 = vmul.f32 %v1177, %v1193
    %v1196 = vadd.f32 %v1067, %v1195
    %v1197 = vld [vmem:[#allocation2 + $0x38] sm:$0xf]
    %v1198 = vld [vmem:[#allocation2 + $0x3c] sm:$0xf]
    %v1199 = vld [vmem:[#allocation2 + $0x40] sm:$0xf]
    %v1200 = vld [vmem:[#allocation2 + $0x44] sm:$0xf]
    %v1201 = vld [vmem:[#allocation2 + $0x48] sm:$0xf]
    %v1202 = vld [vmem:[#allocation2 + $0x4c] sm:$0xf]
    %v1203 = vld [vmem:[#allocation2 + $0x50] sm:$0xf]
    %v1204 = vld [vmem:[#allocation2 + $0x54] sm:$0xf]
    %v1205 = vld [vmem:[#allocation2 + $0x58] sm:$0xf]
    %v1206 = vld [vmem:[#allocation2 + $0x5c] sm:$0xf]
    %v1207 = vld [vmem:[#allocation2 + $0x60] sm:$0xf]
    %v1208 = vld [vmem:[#allocation2 + $0x64] sm:$0xf]
    %v1209 = vld [vmem:[#allocation2 + $0x68] sm:$0xf]
    %v1210 = vld [vmem:[#allocation2 + $0x6c] sm:$0xf]
    %v1211 = vld [vmem:[#allocation2 + $0x70] sm:$0xf]
    %v1212 = vld [vmem:[#allocation2 + $0x74] sm:$0xf]
    %v1213 = vld [vmem:[#allocation2 + $0x78] sm:$0xf]
    %v1214 = vld [vmem:[#allocation2 + $0x7c] sm:$0xf]
    %v1215 = vld [vmem:[#allocation2 + $0x80] sm:$0xf]
    %v1216 = vld [vmem:[#allocation2 + $0x84] sm:$0xf]
    %v1217 = vld [vmem:[#allocation2 + $0x88] sm:$0xf]
    %v1218 = vld [vmem:[#allocation2 + $0x8c] sm:$0xf]
    %v1219 = vld [vmem:[#allocation2 + $0x90] sm:$0xf]
    %v1220 = vld [vmem:[#allocation2 + $0x94] sm:$0xf]
    %v1221 = vld [vmem:[#allocation2 + $0x98] sm:$0xf]
    %v1222 = vld [vmem:[#allocation2 + $0x9c] sm:$0xf]
    %v1223 = vld [vmem:[#allocation2 + $0xa0] sm:$0xf]
    %v1224 = vld [vmem:[#allocation2 + $0xa4] sm:$0xf]
    %v1225 = vld [vmem:[#allocation2 + $0xa8] sm:$0xf]
    %v1226 = vld [vmem:[#allocation2 + $0xac] sm:$0xf]
    %v1227 = vld [vmem:[#allocation2 + $0xb0] sm:$0xf]
    %v1228 = vld [vmem:[#allocation2 + $0xb4] sm:$0xf]
    %v1229 = vld [vmem:[#allocation2 + $0xb8] sm:$0xf]
    %v1230 = vld [vmem:[#allocation2 + $0xbc] sm:$0xf]
    %v1231 = vld [vmem:[#allocation2 + $0xc0] sm:$0xf]
    %v1232 = vld [vmem:[#allocation2 + $0xc4] sm:$0xf]
    %v1233 = vpack.c.bf16 %v1196, %v1196
    %v1234 = vld [vmem:[%s1] sm:$0xff]
    %1236 = vrot.lane.b32.xlu0 %v1233, 32
    %v1237 = vpop.permute.xlu0 %1236
    %v1242 = vunpack.c.l.b16 %v1197
    %v1243 = vunpack.c.l.b16 %v1198
    %v1244 = vunpack.c.l.b16 %v1199
    %v1245 = vunpack.c.l.b16 %v1200
    %v1246 = vpack.c.b16 %v1243, %v1242
    %v1247 = vpack.c.b16 %v1245, %v1244
    %v1251 = vsel %vm135, %v1237, 0
    %1253 = vmatpush.bf16.msra.mxu0 0
    %1254 = vmatpush.bf16.msra.mxu0 0
    %1255 = vmatpush.bf16.msra.mxu0 0
    %1256 = vmatpush.bf16.msra.mxu0 0
    %1257 = vmatpush.bf16.msra.mxu0 0
    %1258 = vmatpush.bf16.msra.mxu0 0
    %1259 = vmatpush.bf16.msra.mxu0 %v1247
    %1260 = vmatpush.bf16.msra.mxu0 %v1246
    %1261 = vmatmul.bf16.gmra.mxu0 %v1251
    %v1262 = vpop.f32.mrf.mxu0
    %v1263 = vadd.f32 %v1234, %v1262
    %v1264 = vpop.f32.mrf.mxu0
    %1265 = vdwg.mxu0
    %v1266 = vmax.f32 %v1263, 0.0
    %v1267 = vpack.c.bf16 %v1266, %v1266
    %v1268 = vperm.slane %v34, 2
    %v1285 = vunpack.c.l.b16 %v1201
    %v1286 = vunpack.c.l.b16 %v1202
    %v1287 = vunpack.c.l.b16 %v1203
    %v1288 = vunpack.c.l.b16 %v1204
    %v1289 = vunpack.c.l.b16 %v1205
    %v1290 = vunpack.c.l.b16 %v1206
    %v1291 = vunpack.c.l.b16 %v1207
    %v1292 = vunpack.c.l.b16 %v1208
    %v1293 = vunpack.c.l.b16 %v1209
    %v1294 = vunpack.c.l.b16 %v1210
    %v1295 = vunpack.c.l.b16 %v1211
    %v1296 = vunpack.c.l.b16 %v1212
    %v1297 = vunpack.c.l.b16 %v1213
    %v1298 = vunpack.c.l.b16 %v1214
    %v1299 = vunpack.c.l.b16 %v1215
    %v1300 = vunpack.c.l.b16 %v1216
    %v1301 = vpack.c.b16 %v1286, %v1285
    %v1302 = vpack.c.b16 %v1288, %v1287
    %v1303 = vpack.c.b16 %v1290, %v1289
    %v1304 = vpack.c.b16 %v1292, %v1291
    %v1305 = vpack.c.b16 %v1294, %v1293
    %v1306 = vpack.c.b16 %v1296, %v1295
    %v1307 = vpack.c.b16 %v1298, %v1297
    %v1308 = vpack.c.b16 %v1300, %v1299
    %1317 = vmatpush.bf16.msra.mxu0 %v1308
    %1318 = vmatpush.bf16.msra.mxu0 %v1307
    %1319 = vmatpush.bf16.msra.mxu0 %v1306
    %1320 = vmatpush.bf16.msra.mxu0 %v1305
    %1321 = vmatpush.bf16.msra.mxu0 %v1304
    %1322 = vmatpush.bf16.msra.mxu0 %v1303
    %1323 = vmatpush.bf16.msra.mxu0 %v1302
    %1324 = vmatpush.bf16.msra.mxu0 %v1301
    %1325 = vmatmul.bf16.gmra.mxu0 %v1267
    %v1326 = vpop.f32.mrf.mxu0
    %v1327 = vadd.f32 %v1268, %v1326
    %v1328 = vpop.f32.mrf.mxu0
    %1329 = vdwg.mxu0
    %v1330 = vmax.f32 %v1327, 0.0
    %v1331 = vpack.c.bf16 %v1330, %v1330
    %v1332 = vperm.slane %v34, 3
    %v1349 = vunpack.c.l.b16 %v1217
    %v1350 = vunpack.c.l.b16 %v1218
    %v1351 = vunpack.c.l.b16 %v1219
    %v1352 = vunpack.c.l.b16 %v1220
    %v1353 = vunpack.c.l.b16 %v1221
    %v1354 = vunpack.c.l.b16 %v1222
    %v1355 = vunpack.c.l.b16 %v1223
    %v1356 = vunpack.c.l.b16 %v1224
    %v1357 = vunpack.c.l.b16 %v1225
    %v1358 = vunpack.c.l.b16 %v1226
    %v1359 = vunpack.c.l.b16 %v1227
    %v1360 = vunpack.c.l.b16 %v1228
    %v1361 = vunpack.c.l.b16 %v1229
    %v1362 = vunpack.c.l.b16 %v1230
    %v1363 = vunpack.c.l.b16 %v1231
    %v1364 = vunpack.c.l.b16 %v1232
    %v1365 = vpack.c.b16 %v1350, %v1349
    %v1366 = vpack.c.b16 %v1352, %v1351
    %v1367 = vpack.c.b16 %v1354, %v1353
    %v1368 = vpack.c.b16 %v1356, %v1355
    %v1369 = vpack.c.b16 %v1358, %v1357
    %v1370 = vpack.c.b16 %v1360, %v1359
    %v1371 = vpack.c.b16 %v1362, %v1361
    %v1372 = vpack.c.b16 %v1364, %v1363
    %1381 = vmatpush.bf16.msra.mxu0 %v1372
    %1382 = vmatpush.bf16.msra.mxu0 %v1371
    %1383 = vmatpush.bf16.msra.mxu0 %v1370
    %1384 = vmatpush.bf16.msra.mxu0 %v1369
    %1385 = vmatpush.bf16.msra.mxu0 %v1368
    %1386 = vmatpush.bf16.msra.mxu0 %v1367
    %1387 = vmatpush.bf16.msra.mxu0 %v1366
    %1388 = vmatpush.bf16.msra.mxu0 %v1365
    %1389 = vmatmul.bf16.gmra.mxu0 %v1331
    %v1390 = vpop.f32.mrf.mxu0
    %v1391 = vadd.f32 %v1332, %v1390
    %v1392 = vpop.f32.mrf.mxu0
    %1393 = vdwg.mxu0
    %v1394 = vmax.f32 %v1391, 0.0
    %v1395 = vperm.slane %v34, 4
    %v1396 = vmul.f32 %v1394, %v1395
    %1397 = vadd.xlane.f32.xlu0 %v1396
    %v1398 = vpop.xlane.xlu0 %1397
    %vm1399 = vcmask 7168
    %1400 = vst.msk [vmem:[%s4] sm:$0xff] %vm1399, %v1398
    // Predicated region
    $region22: #{tpu_custom_call.1} parent=1 // pred_check
      _
    $region23: #{tpu_custom_call.1} parent=1 // pred_check_branch
      %1402 = sbr.rel (0) target = $region25
    $region24: #{tpu_custom_call.1} parent=1 // pred_region
      _
    $region25: #{tpu_custom_call.1} parent=1 // pred_fallthru
      _
    // Predicated region
    $region26: #{tpu_custom_call.1} parent=1 // pred_check
      _
    $region27: #{tpu_custom_call.1} parent=1 // pred_check_branch
      %1404 = sbr.rel (0) target = $region29
    $region28: #{tpu_custom_call.1} parent=1 // pred_region
      _
    $region29: #{tpu_custom_call.1} parent=1 // pred_fallthru
      _
    %1405 = vsyncpa [#allocation3], 1

</llo_original>
